<compile_context>
chip_gen: v5e
topology: v5e:2x2
jax: 0.10.0
libtpu: 0.0.40
codegen_flags: <defaults>
</compile_context>

<pallas_src>
import functools

import jax
import jax.numpy as jnp
import numpy as np
from jax.experimental import pallas as pl
from jax.experimental.pallas import tpu as pltpu

EPS = 1e-8  # asteroid gLN epsilon


def _round_up(x, m):
    return (x + m - 1) // m * m


def _vmem_capacity_bytes():
    """Physical VMEM on the current chip; conservative v7x fallback."""
    try:
        return int(pltpu.get_tpu_info().vmem_capacity_bytes)
    except Exception:
        return 64 << 20


def _conv1d_block_kernel(
    x_ref,       # (1, Cin, Tp)  bf16
    w_in_ref,    # (H, Cin)      bf16
    b_in_ref,    # (H, 1)        f32
    a1_ref,      # (1,)          f32  SMEM (PReLU #1 shared alpha)
    g1_ref,      # (H, 1)        f32  gLN #1 gamma
    be1_ref,     # (H, 1)        f32  gLN #1 beta
    w_dw_ref,    # (H, K)        f32  depthwise weights
    b_dw_ref,    # (H, 1)        f32
    a2_ref,      # (1,)          f32  SMEM (PReLU #2 shared alpha)
    g2_ref,      # (1, H)        f32  gLN #2 gamma (row layout)
    be2_ref,     # (1, H)        f32  gLN #2 beta  (row layout)
    w_out_ref,   # (Cin+S, H)    f32  fused [w_res; w_skip]
    b_out_ref,   # (Cin+S, 1)    f32  fused [b_res; b_skip]
    res_ref,     # (1, Cin, Tp)  out_dtype
    skip_ref,    # (1, S,   Tp)  out_dtype
    *,
    kernel_size: int,
    padding: int,
    dilation: int,
    t_valid: int,      # true input length  (<= Tp)
    t_out_valid: int,  # true output length (<= Tp)
    c_res: int,        # number of residual output channels (Cin)
):
    x = x_ref[0]                                  # (Cin, Tp) bf16
    tp = x.shape[1]
    hid = w_in_ref.shape[0]

    col = jax.lax.broadcasted_iota(jnp.int32, (1, tp), 1)   # hoisted once

    a1 = a1_ref[0]
    a2 = a2_ref[0]

    # ---- 1x1 input conv (MXU, bf16 operands, f32 accumulation) ----
    h = jnp.dot(w_in_ref[...], x, preferred_element_type=jnp.float32)
    h = h + b_in_ref[...]

    # ---- PReLU #1 (single shared alpha) + lane-padding mask ----
    h = jnp.where(h >= 0.0, h, a1 * h)
    if t_valid < tp:
        h = jnp.where(col < t_valid, h, 0.0)      # drop lane-padding columns

    # ---- gLN #1 stats (single pass; scale/shift folded into the depthwise conv) ----
    inv_n1 = 1.0 / float(hid * t_valid)
    mean1 = jnp.sum(h) * inv_n1
    var1 = jnp.maximum(jnp.sum(h * h) * inv_n1 - mean1 * mean1, 0.0)
    rstd1 = jax.lax.rsqrt(var1 + EPS)
    scale1 = g1_ref[...] * rstd1                  # (H, 1)
    shift1 = be1_ref[...] - mean1 * scale1        # (H, 1)

    # gLN #1 folded into the depthwise weights: per-channel scale into the taps,
    # shift into a rank-1 bias with a boundary correction riding on the zero-pad select.
    w_dw = w_dw_ref[...]                          # (H, K)
    w_eff_dw = w_dw * scale1                      # (H, K)
    w_shift = w_dw * shift1                       # (H, K)
    acc0 = b_dw_ref[...] + jnp.sum(w_shift, axis=1, keepdims=True)   # (H, 1)

    # ---- depthwise conv: XLU rolls + hoisted boundary masks (no concat, no hg pass) ----
    tap_masks = []
    for k in range(kernel_size):
        s = k * dilation - padding                # source offset of this tap
        valid = None
        if -s > 0:                                # conv left zero-pad region
            valid = col >= -s
        if t_valid - s < tp:                      # conv right zero-pad / lane-pad region
            m = col < (t_valid - s)
            valid = m if valid is None else jnp.logical_and(valid, m)
        tap_masks.append((s, valid))

    acc = None
    for k, (s, valid) in enumerate(tap_masks):
        tap = h if s == 0 else pltpu.roll(h, shift=(-s) % tp, axis=1)
        prod = w_eff_dw[:, k:k + 1] * tap
        if valid is not None:
            # where valid: w_eff*h_src + w_shift ; where zero-padded: 0
            # (acc0 already added sum_k w_shift, so subtract it back on invalid cols)
            contrib = jnp.where(valid, prod, -w_shift[:, k:k + 1])
        else:
            contrib = prod
        acc = contrib if acc is None else acc + contrib
    acc = acc + acc0                              # (H, Tp)

    # ---- PReLU #2 + output-length mask ----
    acc = jnp.where(acc >= 0.0, acc, a2 * acc)
    if t_out_valid < tp:
        acc = jnp.where(col < t_out_valid, acc, 0.0)

    # ---- gLN #2 stats; scale/shift folded into the fused output weights (f32 fold) ----
    inv_n2 = 1.0 / float(hid * t_out_valid)
    mean2 = jnp.sum(acc) * inv_n2
    var2 = jnp.maximum(jnp.sum(acc * acc) * inv_n2 - mean2 * mean2, 0.0)
    rstd2 = jax.lax.rsqrt(var2 + EPS)
    scale2 = g2_ref[...] * rstd2                  # (1, H)
    shift2 = be2_ref[...] - mean2 * scale2        # (1, H)

    w_out = w_out_ref[...]                                            # (Cin+S, H) f32
    w_eff = (w_out * scale2).astype(jnp.bfloat16)                     # single bf16 quantization
    b_eff = b_out_ref[...] + jnp.sum(w_out * shift2, axis=1, keepdims=True)   # (Cin+S, 1)

    # ---- fused residual + skip 1x1 conv: a single MXU matmul ----
    out = jnp.dot(w_eff, acc.astype(jnp.bfloat16),
                  preferred_element_type=jnp.float32) + b_eff          # (Cin+S, Tp) f32

    # NOTE: columns [t_out_valid, Tp) of `out` hold b_eff (not zeros); the wrapper
    # slices them off and no in-kernel consumer reads them.
    res_ref[0] = out[:c_res].astype(res_ref.dtype)
    skip_ref[0] = out[c_res:].astype(skip_ref.dtype)


def conv1d_block(x, params, *, kernel_size, padding, dilation, out_dtype=jnp.bfloat16):
    """x: (B, in_chan, T) float32. Returns (res, skip) arrays of dtype `out_dtype`."""
    B, c_in, T = x.shape
    hid = params["w_in"].shape[0]
    skip_c = params["w_skip"].shape[0]
    t_out = T + 2 * padding - dilation * (kernel_size - 1)
    tp = _round_up(max(T, t_out), 128)            # lane-dense time axis

    # Lane-pad the time axis; cast MXU operands to bf16 (f32 accumulation in-kernel).
    x_p = x if tp == T else jnp.pad(x, ((0, 0), (0, 0), (0, tp - T)))
    x_p = x_p.astype(jnp.bfloat16)
    w_in = params["w_in"].astype(jnp.bfloat16)
    # Fused residual + skip weights/bias (kept f32; gLN#2 fold + bf16 cast happen in-kernel).
    w_out = jnp.concatenate([params["w_res"], params["w_skip"]], axis=0).astype(jnp.float32)
    b_out = jnp.concatenate([params["b_res"], params["b_skip"]], axis=0).astype(jnp.float32)
    gamma2 = params["gamma2"].reshape(1, hid).astype(jnp.float32)   # row layout for weight folding
    beta2 = params["beta2"].reshape(1, hid).astype(jnp.float32)
    alpha1 = params["alpha1"].reshape(1).astype(jnp.float32)        # SMEM scalars
    alpha2 = params["alpha2"].reshape(1).astype(jnp.float32)

    kernel = functools.partial(
        _conv1d_block_kernel,
        kernel_size=kernel_size,
        padding=padding,
        dilation=dilation,
        t_valid=T,
        t_out_valid=t_out,
        c_res=c_in,
    )

    def fixed(shape):
        # whole-array parameter block, identical for every grid step (fetched once)
        return pl.BlockSpec(shape, lambda b: (0,) * len(shape))

    smem = pl.BlockSpec(memory_space=pltpu.MemorySpace.SMEM)

    grid_spec = pltpu.PrefetchScalarGridSpec(
        num_scalar_prefetch=0,
        grid=(B,),
        in_specs=[
            pl.BlockSpec((1, c_in, tp), lambda b: (b, 0, 0)),   # x
            fixed((hid, c_in)),                                 # w_in (bf16)
            fixed((hid, 1)),                                    # b_in
            smem,                                               # alpha1 (SMEM scalar)
            fixed((hid, 1)),                                    # gamma1
            fixed((hid, 1)),                                    # beta1
            fixed((hid, kernel_size)),                          # w_dw
            fixed((hid, 1)),                                    # b_dw
            smem,                                               # alpha2 (SMEM scalar)
            fixed((1, hid)),                                    # gamma2 (row)
            fixed((1, hid)),                                    # beta2  (row)
            fixed((c_in + skip_c, hid)),                        # fused [w_res; w_skip] (f32)
            fixed((c_in + skip_c, 1)),                          # fused bias
        ],
        out_specs=[
            pl.BlockSpec((1, c_in, tp), lambda b: (b, 0, 0)),
            pl.BlockSpec((1, skip_c, tp), lambda b: (b, 0, 0)),
        ],
    )

    # Per-step VMEM estimate (double-buffered I/O + live (H,Tp)/(Cin+S,Tp) intermediates
    # + params), capped against the chip's PHYSICAL VMEM minus headroom (v7x: 64 MiB).
    out_itemsize = jnp.dtype(out_dtype).itemsize
    io_bytes = 2 * tp * (2 * c_in + out_itemsize * (c_in + skip_c))
    interm_bytes = (4 * hid + 2 * (c_in + skip_c)) * tp * 4
    param_bytes = 4 * (hid * (c_in + kernel_size + 6) + (c_in + skip_c) * (hid + 1))
    est = io_bytes + interm_bytes + 2 * param_bytes + (2 << 20)
    vmem_cap = _vmem_capacity_bytes()
    vmem_limit = int(min(max(est, 8 << 20), vmem_cap - (8 << 20)))
    # TODO(synk): when `est` exceeds ~0.75*vmem_cap (hid=512, very long T), switch to the
    #             T-tiled two-pass-gLN kernel instead of the whole-T block used here.

    cost = pl.CostEstimate(
        flops=2 * B * tp * hid * (c_in + c_in + skip_c) + 12 * B * hid * tp,
        transcendentals=4 * B,
        bytes_accessed=int(x_p.size * 2 + B * (c_in + skip_c) * tp * out_itemsize
                           + param_bytes),
    )

    res_p, skip_p = pl.pallas_call(
        kernel,
        grid_spec=grid_spec,
        out_shape=(
            jax.ShapeDtypeStruct((B, c_in, tp), out_dtype),
            jax.ShapeDtypeStruct((B, skip_c, tp), out_dtype),
        ),
        compiler_params=pltpu.CompilerParams(
            dimension_semantics=("parallel",),
            vmem_limit_bytes=vmem_limit,
        ),
        cost_estimate=cost,
    )(
        x_p,
        w_in, params["b_in"],
        alpha1, params["gamma1"], params["beta1"],
        params["w_dw"], params["b_dw"],
        alpha2, gamma2, beta2,
        w_out, b_out,
    )
    return res_p[..., :t_out], skip_p[..., :t_out]


def _reference(x, p, *, kernel_size, padding, dilation):
    """Pure-JAX f32 reference replicating the PyTorch forward semantics."""
    B, c_in, T = x.shape
    t_out = T + 2 * padding - dilation * (kernel_size - 1)

    def gln(h, gamma, beta):
        mean = jnp.mean(h, axis=(1, 2), keepdims=True)
        var = jnp.mean((h - mean) ** 2, axis=(1, 2), keepdims=True)
        return (h - mean) / jnp.sqrt(var + EPS) * gamma[None] + beta[None]

    h = jnp.einsum("hc,bct->bht", p["w_in"], x) + p["b_in"][None]
    h = jnp.where(h >= 0, h, p["alpha1"][0, 0] * h)
    h = gln(h, p["gamma1"], p["beta1"])

    hp = jnp.pad(h, ((0, 0), (0, 0), (padding, padding)))
    acc = jnp.zeros((B, h.shape[1], t_out), jnp.float32)
    for k in range(kernel_size):
        s = k * dilation
        acc = acc + p["w_dw"][None, :, k: k + 1] * hp[:, :, s: s + t_out]
    acc = acc + p["b_dw"][None]
    acc = jnp.where(acc >= 0, acc, p["alpha2"][0, 0] * acc)
    hn = gln(acc, p["gamma2"], p["beta2"])

    res = jnp.einsum("ch,bht->bct", p["w_res"], hn) + p["b_res"][None]
    skip = jnp.einsum("sh,bht->bst", p["w_skip"], hn) + p["b_skip"][None]
    return res, skip


if __name__ == "__main__":
    # Small shapes consistent with the module's forward: x is (batch, feats, seq).
    B, in_chan, hid_chan, skip_out_chan, T = 2, 16, 32, 16, 128
    kernel_size, dilation = 3, 2
    padding = dilation * (kernel_size - 1) // 2  # "same"-style padding, causal=False

    key = jax.random.PRNGKey(0)
    ks = jax.random.split(key, 13)
    params = {
        "w_in":   0.1 * jax.random.normal(ks[0], (hid_chan, in_chan), jnp.float32),
        "b_in":   0.1 * jax.random.normal(ks[1], (hid_chan, 1), jnp.float32),
        "alpha1": jnp.full((1, 1), 0.25, jnp.float32),   # nn.PReLU() default
        "gamma1": 1.0 + 0.1 * jax.random.normal(ks[2], (hid_chan, 1), jnp.float32),
        "beta1":  0.1 * jax.random.normal(ks[3], (hid_chan, 1), jnp.float32),
        "w_dw":   0.1 * jax.random.normal(ks[4], (hid_chan, kernel_size), jnp.float32),
        "b_dw":   0.1 * jax.random.normal(ks[5], (hid_chan, 1), jnp.float32),
        "alpha2": jnp.full((1, 1), 0.25, jnp.float32),
        "gamma2": 1.0 + 0.1 * jax.random.normal(ks[6], (hid_chan, 1), jnp.float32),
        "beta2":  0.1 * jax.random.normal(ks[7], (hid_chan, 1), jnp.float32),
        "w_res":  0.1 * jax.random.normal(ks[8], (in_chan, hid_chan), jnp.float32),
        "b_res":  0.1 * jax.random.normal(ks[9], (in_chan, 1), jnp.float32),
        "w_skip": 0.1 * jax.random.normal(ks[10], (skip_out_chan, hid_chan), jnp.float32),
        "b_skip": 0.1 * jax.random.normal(ks[11], (skip_out_chan, 1), jnp.float32),
    }

    x_full = jax.random.normal(ks[12], (B, in_chan, T), jnp.float32)

    # Cases: lane-aligned T (128) and unaligned T (100, exercises padding+masking), in
    # both f32 (exact module semantics) and bf16 (optimized writeback) output dtypes.
    cases = [(T, jnp.float32, 2e-2), (100, jnp.float32, 2e-2), (100, jnp.bfloat16, 3e-2)]
    for t_case, odt, tol in cases:
        x = x_full[..., :t_case]
        res, skip = conv1d_block(
            x, params, kernel_size=kernel_size, padding=padding, dilation=dilation,
            out_dtype=odt,
        )
        res, skip = jax.block_until_ready((res, skip))

        res_ref, skip_ref = _reference(
            x, params, kernel_size=kernel_size, padding=padding, dilation=dilation
        )
        np.testing.assert_allclose(np.asarray(res.astype(jnp.float32)),
                                   np.asarray(res_ref), rtol=tol, atol=tol)
        np.testing.assert_allclose(np.asarray(skip.astype(jnp.float32)),
                                   np.asarray(skip_ref), rtol=tol, atol=tol)

    print("KERNEL_OK")
</pallas_src>

<mosaic_0001>
module attributes {stable_mosaic.version = 11 : i64} {
  func.func @_conv1d_block_kernel(%arg0: i32, %arg1: memref<1x16x128xbf16, #tpu.memory_space<vmem>>, %arg2: memref<32x16xbf16, #tpu.memory_space<vmem>>, %arg3: memref<32x1xf32, #tpu.memory_space<vmem>>, %arg4: memref<1xf32, #tpu.memory_space<smem>>, %arg5: memref<32x1xf32, #tpu.memory_space<vmem>>, %arg6: memref<32x1xf32, #tpu.memory_space<vmem>>, %arg7: memref<32x3xf32, #tpu.memory_space<vmem>>, %arg8: memref<32x1xf32, #tpu.memory_space<vmem>>, %arg9: memref<1xf32, #tpu.memory_space<smem>>, %arg10: memref<1x32xf32, #tpu.memory_space<vmem>>, %arg11: memref<1x32xf32, #tpu.memory_space<vmem>>, %arg12: memref<32x32xf32, #tpu.memory_space<vmem>>, %arg13: memref<32x1xf32, #tpu.memory_space<vmem>>, %arg14: memref<1x16x128xf32, #tpu.memory_space<vmem>>, %arg15: memref<1x16x128xf32, #tpu.memory_space<vmem>>) attributes {dimension_semantics = [#tpu.dimension_semantics<parallel>], iteration_bounds = array<i64: 2>, scalar_prefetch = 0 : i64, scratch_operands = 0 : i64, tpu.core_type = #tpu.core_type<tc>, window_params = [{transform_indices = @transform_0, window_bounds = array<i64: 1, 16, 128>}, {pipeline_mode = #tpu.pipeline_mode<synchronous>, transform_indices = @transform_1, window_bounds = array<i64: 32, 16>}, {pipeline_mode = #tpu.pipeline_mode<synchronous>, transform_indices = @transform_2, window_bounds = array<i64: 32, 1>}, {transform_indices = @transform_3, window_bounds = array<i64: 1>}, {pipeline_mode = #tpu.pipeline_mode<synchronous>, transform_indices = @transform_4, window_bounds = array<i64: 32, 1>}, {pipeline_mode = #tpu.pipeline_mode<synchronous>, transform_indices = @transform_5, window_bounds = array<i64: 32, 1>}, {pipeline_mode = #tpu.pipeline_mode<synchronous>, transform_indices = @transform_6, window_bounds = array<i64: 32, 3>}, {pipeline_mode = #tpu.pipeline_mode<synchronous>, transform_indices = @transform_7, window_bounds = array<i64: 32, 1>}, {transform_indices = @transform_8, window_bounds = array<i64: 1>}, {pipeline_mode = #tpu.pipeline_mode<synchronous>, transform_indices = @transform_9, window_bounds = array<i64: 1, 32>}, {pipeline_mode = #tpu.pipeline_mode<synchronous>, transform_indices = @transform_10, window_bounds = array<i64: 1, 32>}, {pipeline_mode = #tpu.pipeline_mode<synchronous>, transform_indices = @transform_11, window_bounds = array<i64: 32, 32>}, {pipeline_mode = #tpu.pipeline_mode<synchronous>, transform_indices = @transform_12, window_bounds = array<i64: 32, 1>}, {transform_indices = @transform_13, window_bounds = array<i64: 1, 16, 128>}, {transform_indices = @transform_14, window_bounds = array<i64: 1, 16, 128>}]} {
    %c0 = arith.constant 0 : index
    %c0_0 = arith.constant 0 : index
    %c0_1 = arith.constant 0 : index
    %0 = vector.load %arg1[%c0, %c0_0, %c0_1] : memref<1x16x128xbf16, #tpu.memory_space<vmem>>, vector<1x16x128xbf16>
    %1 = vector.shape_cast %0 : vector<1x16x128xbf16> to vector<16x128xbf16>
    %2 = tpu.iota {dimensions = array<i32: 1>} : vector<1x128xi32>
    %c0_2 = arith.constant 0 : index
    %3 = memref.load %arg4[%c0_2] : memref<1xf32, #tpu.memory_space<smem>>
    %c0_3 = arith.constant 0 : index
    %4 = memref.load %arg9[%c0_3] : memref<1xf32, #tpu.memory_space<smem>>
    %c0_4 = arith.constant 0 : index
    %c0_5 = arith.constant 0 : index
    %5 = vector.load %arg2[%c0_4, %c0_5] : memref<32x16xbf16, #tpu.memory_space<vmem>>, vector<32x16xbf16>
    %cst = arith.constant dense<0.000000e+00> : vector<32x128xf32>
    %6 = tpu.matmul %5, %1, %cst {dimension_numbers = #tpu.dot_dimension_numbers<[1], [0], [0], [1], [0, 0, 1, 1], [], []>} : vector<32x16xbf16>, vector<16x128xbf16>, vector<32x128xf32> -> vector<32x128xf32>
    %c0_6 = arith.constant 0 : index
    %c0_7 = arith.constant 0 : index
    %7 = vector.load %arg3[%c0_6, %c0_7] : memref<32x1xf32, #tpu.memory_space<vmem>>, vector<32x1xf32>
    %8 = vector.broadcast %7 : vector<32x1xf32> to vector<32x128xf32>
    %9 = arith.addf %6, %8 : vector<32x128xf32>
    %cst_8 = arith.constant 0.000000e+00 : f32
    %10 = vector.broadcast %cst_8 : f32 to vector<32x128xf32>
    %11 = arith.cmpf oge, %9, %10 : vector<32x128xf32>
    %12 = vector.broadcast %3 : f32 to vector<32x128xf32>
    %13 = arith.mulf %12, %9 : vector<32x128xf32>
    %14 = arith.select %11, %9, %13 : vector<32x128xi1>, vector<32x128xf32>
    %15 = vector.shape_cast %14 : vector<32x128xf32> to vector<1x32x128xf32>
    %cst_9 = arith.constant dense<0.000000e+00> : vector<1xf32>
    %16 = vector.multi_reduction <add>, %15, %cst_9 [1, 2] : vector<1x32x128xf32> to vector<1xf32>
    %17 = vector.shape_cast %16 : vector<1xf32> to vector<1x1x1xf32>
    %18 = vector.extract %17[0, 0, 0] : f32 from vector<1x1x1xf32>
    %cst_10 = arith.constant 2.44140625E-4 : f32
    %19 = arith.mulf %18, %cst_10 : f32
    %20 = arith.mulf %14, %14 : vector<32x128xf32>
    %21 = vector.shape_cast %20 : vector<32x128xf32> to vector<1x32x128xf32>
    %cst_11 = arith.constant dense<0.000000e+00> : vector<1xf32>
    %22 = vector.multi_reduction <add>, %21, %cst_11 [1, 2] : vector<1x32x128xf32> to vector<1xf32>
    %23 = vector.shape_cast %22 : vector<1xf32> to vector<1x1x1xf32>
    %24 = vector.extract %23[0, 0, 0] : f32 from vector<1x1x1xf32>
    %cst_12 = arith.constant 2.44140625E-4 : f32
    %25 = arith.mulf %24, %cst_12 : f32
    %26 = arith.mulf %19, %19 : f32
    %27 = arith.subf %25, %26 : f32
    %cst_13 = arith.constant 0.000000e+00 : f32
    %28 = arith.maximumf %27, %cst_13 : f32
    %cst_14 = arith.constant 9.99999993E-9 : f32
    %29 = arith.addf %28, %cst_14 : f32
    %30 = math.rsqrt %29 : f32
    %c0_15 = arith.constant 0 : index
    %c0_16 = arith.constant 0 : index
    %31 = vector.load %arg5[%c0_15, %c0_16] : memref<32x1xf32, #tpu.memory_space<vmem>>, vector<32x1xf32>
    %32 = vector.broadcast %30 : f32 to vector<32x1xf32>
    %33 = arith.mulf %31, %32 : vector<32x1xf32>
    %c0_17 = arith.constant 0 : index
    %c0_18 = arith.constant 0 : index
    %34 = vector.load %arg6[%c0_17, %c0_18] : memref<32x1xf32, #tpu.memory_space<vmem>>, vector<32x1xf32>
    %35 = vector.broadcast %19 : f32 to vector<32x1xf32>
    %36 = arith.mulf %35, %33 : vector<32x1xf32>
    %37 = arith.subf %34, %36 : vector<32x1xf32>
    %c0_19 = arith.constant 0 : index
    %c0_20 = arith.constant 0 : index
    %38 = vector.load %arg7[%c0_19, %c0_20] : memref<32x3xf32, #tpu.memory_space<vmem>>, vector<32x3xf32>
    %39 = vector.broadcast %33 : vector<32x1xf32> to vector<32x3xf32>
    %40 = arith.mulf %38, %39 : vector<32x3xf32>
    %41 = vector.broadcast %37 : vector<32x1xf32> to vector<32x3xf32>
    %42 = arith.mulf %38, %41 : vector<32x3xf32>
    %c0_21 = arith.constant 0 : index
    %c0_22 = arith.constant 0 : index
    %43 = vector.load %arg8[%c0_21, %c0_22] : memref<32x1xf32, #tpu.memory_space<vmem>>, vector<32x1xf32>
    %cst_23 = arith.constant dense<0.000000e+00> : vector<32xf32>
    %44 = vector.multi_reduction <add>, %42, %cst_23 [1] : vector<32x3xf32> to vector<32xf32>
    %45 = vector.shape_cast %44 : vector<32xf32> to vector<32x1xf32>
    %46 = arith.addf %43, %45 : vector<32x1xf32>
    %c2_i32 = arith.constant 2 : i32
    %47 = vector.broadcast %c2_i32 : i32 to vector<1x128xi32>
    %48 = arith.cmpi sge, %2, %47 : vector<1x128xi32>
    %c126_i32 = arith.constant 126 : i32
    %49 = vector.broadcast %c126_i32 : i32 to vector<1x128xi32>
    %50 = arith.cmpi slt, %2, %49 : vector<1x128xi32>
    %c2_i32_24 = arith.constant 2 : i32
    %51 = tpu.dynamic_rotate %14 by %c2_i32_24 dim 1 : vector<32x128xf32>, i32 -> vector<32x128xf32>
    %52 = vector.extract_strided_slice %40 {offsets = [0, 0], sizes = [32, 1], strides = [1, 1]} : vector<32x3xf32> to vector<32x1xf32>
    %53 = vector.broadcast %52 : vector<32x1xf32> to vector<32x128xf32>
    %54 = arith.mulf %53, %51 : vector<32x128xf32>
    %55 = vector.extract_strided_slice %42 {offsets = [0, 0], sizes = [32, 1], strides = [1, 1]} : vector<32x3xf32> to vector<32x1xf32>
    %cst_25 = arith.constant 0.000000e+00 : f32
    %56 = vector.broadcast %cst_25 : f32 to vector<32x1xf32>
    %57 = arith.subf %56, %55 : vector<32x1xf32>
    %58 = vector.shape_cast %48 : vector<1x128xi1> to vector<1x128xi1>
    %59 = vector.broadcast %58 : vector<1x128xi1> to vector<32x128xi1>
    %60 = vector.shape_cast %57 : vector<32x1xf32> to vector<32x1xf32>
    %61 = vector.broadcast %60 : vector<32x1xf32> to vector<32x128xf32>
    %62 = arith.select %59, %54, %61 : vector<32x128xi1>, vector<32x128xf32>
    %63 = vector.extract_strided_slice %40 {offsets = [0, 1], sizes = [32, 1], strides = [1, 1]} : vector<32x3xf32> to vector<32x1xf32>
    %64 = vector.broadcast %63 : vector<32x1xf32> to vector<32x128xf32>
    %65 = arith.mulf %64, %14 : vector<32x128xf32>
    %66 = arith.addf %62, %65 : vector<32x128xf32>
    %c126_i32_26 = arith.constant 126 : i32
    %67 = tpu.dynamic_rotate %14 by %c126_i32_26 dim 1 : vector<32x128xf32>, i32 -> vector<32x128xf32>
    %68 = vector.extract_strided_slice %40 {offsets = [0, 2], sizes = [32, 1], strides = [1, 1]} : vector<32x3xf32> to vector<32x1xf32>
    %69 = vector.broadcast %68 : vector<32x1xf32> to vector<32x128xf32>
    %70 = arith.mulf %69, %67 : vector<32x128xf32>
    %71 = vector.extract_strided_slice %42 {offsets = [0, 2], sizes = [32, 1], strides = [1, 1]} : vector<32x3xf32> to vector<32x1xf32>
    %cst_27 = arith.constant 0.000000e+00 : f32
    %72 = vector.broadcast %cst_27 : f32 to vector<32x1xf32>
    %73 = arith.subf %72, %71 : vector<32x1xf32>
    %74 = vector.shape_cast %50 : vector<1x128xi1> to vector<1x128xi1>
    %75 = vector.broadcast %74 : vector<1x128xi1> to vector<32x128xi1>
    %76 = vector.shape_cast %73 : vector<32x1xf32> to vector<32x1xf32>
    %77 = vector.broadcast %76 : vector<32x1xf32> to vector<32x128xf32>
    %78 = arith.select %75, %70, %77 : vector<32x128xi1>, vector<32x128xf32>
    %79 = arith.addf %66, %78 : vector<32x128xf32>
    %80 = vector.broadcast %46 : vector<32x1xf32> to vector<32x128xf32>
    %81 = arith.addf %79, %80 : vector<32x128xf32>
    %cst_28 = arith.constant 0.000000e+00 : f32
    %82 = vector.broadcast %cst_28 : f32 to vector<32x128xf32>
    %83 = arith.cmpf oge, %81, %82 : vector<32x128xf32>
    %84 = vector.broadcast %4 : f32 to vector<32x128xf32>
    %85 = arith.mulf %84, %81 : vector<32x128xf32>
    %86 = arith.select %83, %81, %85 : vector<32x128xi1>, vector<32x128xf32>
    %87 = vector.shape_cast %86 : vector<32x128xf32> to vector<1x32x128xf32>
    %cst_29 = arith.constant dense<0.000000e+00> : vector<1xf32>
    %88 = vector.multi_reduction <add>, %87, %cst_29 [1, 2] : vector<1x32x128xf32> to vector<1xf32>
    %89 = vector.shape_cast %88 : vector<1xf32> to vector<1x1x1xf32>
    %90 = vector.extract %89[0, 0, 0] : f32 from vector<1x1x1xf32>
    %cst_30 = arith.constant 2.44140625E-4 : f32
    %91 = arith.mulf %90, %cst_30 : f32
    %92 = arith.mulf %86, %86 : vector<32x128xf32>
    %93 = vector.shape_cast %92 : vector<32x128xf32> to vector<1x32x128xf32>
    %cst_31 = arith.constant dense<0.000000e+00> : vector<1xf32>
    %94 = vector.multi_reduction <add>, %93, %cst_31 [1, 2] : vector<1x32x128xf32> to vector<1xf32>
    %95 = vector.shape_cast %94 : vector<1xf32> to vector<1x1x1xf32>
    %96 = vector.extract %95[0, 0, 0] : f32 from vector<1x1x1xf32>
    %cst_32 = arith.constant 2.44140625E-4 : f32
    %97 = arith.mulf %96, %cst_32 : f32
    %98 = arith.mulf %91, %91 : f32
    %99 = arith.subf %97, %98 : f32
    %cst_33 = arith.constant 0.000000e+00 : f32
    %100 = arith.maximumf %99, %cst_33 : f32
    %cst_34 = arith.constant 9.99999993E-9 : f32
    %101 = arith.addf %100, %cst_34 : f32
    %102 = math.rsqrt %101 : f32
    %c0_35 = arith.constant 0 : index
    %c0_36 = arith.constant 0 : index
    %103 = vector.load %arg10[%c0_35, %c0_36] : memref<1x32xf32, #tpu.memory_space<vmem>>, vector<1x32xf32>
    %104 = vector.broadcast %102 : f32 to vector<1x32xf32>
    %105 = arith.mulf %103, %104 : vector<1x32xf32>
    %c0_37 = arith.constant 0 : index
    %c0_38 = arith.constant 0 : index
    %106 = vector.load %arg11[%c0_37, %c0_38] : memref<1x32xf32, #tpu.memory_space<vmem>>, vector<1x32xf32>
    %107 = vector.broadcast %91 : f32 to vector<1x32xf32>
    %108 = arith.mulf %107, %105 : vector<1x32xf32>
    %109 = arith.subf %106, %108 : vector<1x32xf32>
    %c0_39 = arith.constant 0 : index
    %c0_40 = arith.constant 0 : index
    %110 = vector.load %arg12[%c0_39, %c0_40] : memref<32x32xf32, #tpu.memory_space<vmem>>, vector<32x32xf32>
    %111 = vector.broadcast %105 : vector<1x32xf32> to vector<32x32xf32>
    %112 = arith.mulf %110, %111 : vector<32x32xf32>
    %113 = arith.truncf %112 : vector<32x32xf32> to vector<32x32xbf16>
    %c0_41 = arith.constant 0 : index
    %c0_42 = arith.constant 0 : index
    %114 = vector.load %arg13[%c0_41, %c0_42] : memref<32x1xf32, #tpu.memory_space<vmem>>, vector<32x1xf32>
    %115 = vector.broadcast %109 : vector<1x32xf32> to vector<32x32xf32>
    %116 = arith.mulf %110, %115 : vector<32x32xf32>
    %cst_43 = arith.constant dense<0.000000e+00> : vector<32xf32>
    %117 = vector.multi_reduction <add>, %116, %cst_43 [1] : vector<32x32xf32> to vector<32xf32>
    %118 = vector.shape_cast %117 : vector<32xf32> to vector<32x1xf32>
    %119 = arith.addf %114, %118 : vector<32x1xf32>
    %120 = arith.truncf %86 : vector<32x128xf32> to vector<32x128xbf16>
    %cst_44 = arith.constant dense<0.000000e+00> : vector<32x128xf32>
    %121 = tpu.matmul %113, %120, %cst_44 {dimension_numbers = #tpu.dot_dimension_numbers<[1], [0], [0], [1], [0, 0, 1, 1], [], []>} : vector<32x32xbf16>, vector<32x128xbf16>, vector<32x128xf32> -> vector<32x128xf32>
    %122 = vector.broadcast %119 : vector<32x1xf32> to vector<32x128xf32>
    %123 = arith.addf %121, %122 : vector<32x128xf32>
    %124 = vector.extract_strided_slice %123 {offsets = [0, 0], sizes = [16, 128], strides = [1, 1]} : vector<32x128xf32> to vector<16x128xf32>
    %c0_45 = arith.constant 0 : index
    %c0_46 = arith.constant 0 : index
    %c0_47 = arith.constant 0 : index
    %125 = vector.load %arg14[%c0_45, %c0_46, %c0_47] : memref<1x16x128xf32, #tpu.memory_space<vmem>>, vector<1x16x128xf32>
    %126 = vector.shape_cast %125 : vector<1x16x128xf32> to vector<16x128xf32>
    %127 = vector.shape_cast %124 : vector<16x128xf32> to vector<1x16x128xf32>
    tpu.vector_store %arg14[%c0_45, %c0_46, %c0_47], %127 {strides = array<i32>} : memref<1x16x128xf32, #tpu.memory_space<vmem>>, vector<1x16x128xf32>,
    %128 = vector.extract_strided_slice %123 {offsets = [16, 0], sizes = [16, 128], strides = [1, 1]} : vector<32x128xf32> to vector<16x128xf32>
    %c0_48 = arith.constant 0 : index
    %c0_49 = arith.constant 0 : index
    %c0_50 = arith.constant 0 : index
    %129 = vector.load %arg15[%c0_48, %c0_49, %c0_50] : memref<1x16x128xf32, #tpu.memory_space<vmem>>, vector<1x16x128xf32>
    %130 = vector.shape_cast %129 : vector<1x16x128xf32> to vector<16x128xf32>
    %131 = vector.shape_cast %128 : vector<16x128xf32> to vector<1x16x128xf32>
    tpu.vector_store %arg15[%c0_48, %c0_49, %c0_50], %131 {strides = array<i32>} : memref<1x16x128xf32, #tpu.memory_space<vmem>>, vector<1x16x128xf32>,
    return
  }
  func.func @transform_0(%arg0: i32) -> (i32, i32, i32) {
    %c0_i32 = arith.constant 0 : i32
    %c0_i32_0 = arith.constant 0 : i32
    %c0_i32_1 = arith.constant 0 : i32
    return %arg0, %c0_i32, %c0_i32_0 : i32, i32, i32
  }
  func.func @transform_1(%arg0: i32) -> (i32, i32) {
    %c0_i32 = arith.constant 0 : i32
    %c0_i32_0 = arith.constant 0 : i32
    %c0_i32_1 = arith.constant 0 : i32
    return %c0_i32, %c0_i32_0 : i32, i32
  }
  func.func @transform_2(%arg0: i32) -> (i32, i32) {
    %c0_i32 = arith.constant 0 : i32
    %c0_i32_0 = arith.constant 0 : i32
    %c0_i32_1 = arith.constant 0 : i32
    return %c0_i32, %c0_i32_0 : i32, i32
  }
  func.func @transform_3(%arg0: i32) -> i32 {
    %c0_i32 = arith.constant 0 : i32
    %c0_i32_0 = arith.constant 0 : i32
    return %c0_i32 : i32
  }
  func.func @transform_4(%arg0: i32) -> (i32, i32) {
    %c0_i32 = arith.constant 0 : i32
    %c0_i32_0 = arith.constant 0 : i32
    %c0_i32_1 = arith.constant 0 : i32
    return %c0_i32, %c0_i32_0 : i32, i32
  }
  func.func @transform_5(%arg0: i32) -> (i32, i32) {
    %c0_i32 = arith.constant 0 : i32
    %c0_i32_0 = arith.constant 0 : i32
    %c0_i32_1 = arith.constant 0 : i32
    return %c0_i32, %c0_i32_0 : i32, i32
  }
  func.func @transform_6(%arg0: i32) -> (i32, i32) {
    %c0_i32 = arith.constant 0 : i32
    %c0_i32_0 = arith.constant 0 : i32
    %c0_i32_1 = arith.constant 0 : i32
    return %c0_i32, %c0_i32_0 : i32, i32
  }
  func.func @transform_7(%arg0: i32) -> (i32, i32) {
    %c0_i32 = arith.constant 0 : i32
    %c0_i32_0 = arith.constant 0 : i32
    %c0_i32_1 = arith.constant 0 : i32
    return %c0_i32, %c0_i32_0 : i32, i32
  }
  func.func @transform_8(%arg0: i32) -> i32 {
    %c0_i32 = arith.constant 0 : i32
    %c0_i32_0 = arith.constant 0 : i32
    return %c0_i32 : i32
  }
  func.func @transform_9(%arg0: i32) -> (i32, i32) {
    %c0_i32 = arith.constant 0 : i32
    %c0_i32_0 = arith.constant 0 : i32
    %c0_i32_1 = arith.constant 0 : i32
    return %c0_i32, %c0_i32_0 : i32, i32
  }
  func.func @transform_10(%arg0: i32) -> (i32, i32) {
    %c0_i32 = arith.constant 0 : i32
    %c0_i32_0 = arith.constant 0 : i32
    %c0_i32_1 = arith.constant 0 : i32
    return %c0_i32, %c0_i32_0 : i32, i32
  }
  func.func @transform_11(%arg0: i32) -> (i32, i32) {
    %c0_i32 = arith.constant 0 : i32
    %c0_i32_0 = arith.constant 0 : i32
    %c0_i32_1 = arith.constant 0 : i32
    return %c0_i32, %c0_i32_0 : i32, i32
  }
  func.func @transform_12(%arg0: i32) -> (i32, i32) {
    %c0_i32 = arith.constant 0 : i32
    %c0_i32_0 = arith.constant 0 : i32
    %c0_i32_1 = arith.constant 0 : i32
    return %c0_i32, %c0_i32_0 : i32, i32
  }
  func.func @transform_13(%arg0: i32) -> (i32, i32, i32) {
    %c0_i32 = arith.constant 0 : i32
    %c0_i32_0 = arith.constant 0 : i32
    %c0_i32_1 = arith.constant 0 : i32
    return %arg0, %c0_i32, %c0_i32_0 : i32, i32, i32
  }
  func.func @transform_14(%arg0: i32) -> (i32, i32, i32) {
    %c0_i32 = arith.constant 0 : i32
    %c0_i32_0 = arith.constant 0 : i32
    %c0_i32_1 = arith.constant 0 : i32
    return %arg0, %c0_i32, %c0_i32_0 : i32, i32, i32
  }
}

</mosaic_0001>

<llo_original>
// kernel: tpu_custom_call.1
$region0: #{tpu_custom_call.1}
  #allocation0 [shape = 'u32[]', space=smem, size = 0x4, offset = 0x4, fixed_abs, tag = 'smem constant byte address 0x4 - core index']
  #allocation1 [shape = 'u32[72,128]{1,0:T(1,128)}', space=vmem, size = 0x9000, scoped, tag = 'internal scratch']
  #allocation2 [shape = 'f32[1]{0:T(128)S(6)}', space=smem, size = 0x200, scoped, tag = 'scoped memory for tpu_custom_call.1']
  #allocation3 [shape = 'f32[1]{0:T(128)S(6)}', space=smem, size = 0x200, scoped, tag = 'scoped memory for tpu_custom_call.1']
  %s0 = inlined_call_operand.vmem [shape: bf16[2,16,128], index: 0, kind: input, shape index: {}]
  %s1 = inlined_call_operand.vmem [shape: bf16[32,16], index: 1, kind: input, shape index: {}]
  %s2 = inlined_call_operand.vmem [shape: f32[32,1], index: 2, kind: input, shape index: {}]
  %s3 = inlined_call_operand.<no memory space> [shape: f32[1], index: 3, kind: input, shape index: {}]
  %s4 = inlined_call_operand.vmem [shape: f32[32,1], index: 4, kind: input, shape index: {}]
  %s5 = inlined_call_operand.vmem [shape: f32[32,1], index: 5, kind: input, shape index: {}]
  %s6 = inlined_call_operand.vmem [shape: f32[32,3], index: 6, kind: input, shape index: {}]
  %s7 = inlined_call_operand.vmem [shape: f32[32,1], index: 7, kind: input, shape index: {}]
  %s8 = inlined_call_operand.<no memory space> [shape: f32[1], index: 8, kind: input, shape index: {}]
  %s9 = inlined_call_operand.vmem [shape: f32[1,32], index: 9, kind: input, shape index: {}]
  %s10 = inlined_call_operand.vmem [shape: f32[1,32], index: 10, kind: input, shape index: {}]
  %s11 = inlined_call_operand.vmem [shape: f32[32,32], index: 11, kind: input, shape index: {}]
  %s12 = inlined_call_operand.vmem [shape: f32[32,1], index: 12, kind: input, shape index: {}]
  %s13 = inlined_call_operand.hbm [shape: f32[2,16,128], index: 13, kind: output, shape index: {0}]
  %s14 = inlined_call_operand.hbm [shape: f32[2,16,128], index: 14, kind: output, shape index: {1}]
  %15 = xla_tuple %s13, %s14
  %s16 = sld [smem:[#allocation0]]
  $region93: #{tpu_custom_call.1} parent=0
    _
  %s18 = ssub.s32 1, %s16
  %s19 = scalar_select 0, %s18, %s16
  %20 = sst [smem:[#allocation2]] %s3
  %21 = sst [smem:[#allocation3]] %s8
  $region1: #{tpu_custom_call.1} parent=0
    #allocation4 [shape = 'u8[16384]{0}', space=vmem, size = 0x4000, scoped, tag = 'output window, operand 0']
    #allocation5 [shape = 's32[2]{0}', space=sflag, size = 0x8, scoped, tag = 'scoped memory for tpu_custom_call.1']
    #allocation6 [shape = 'u8[16384]{0}', space=vmem, size = 0x4000, scoped, tag = 'output window, operand 1']
    #allocation7 [shape = 's32[2]{0}', space=sflag, size = 0x8, scoped, tag = 'scoped memory for tpu_custom_call.1']
    %22 = vsyncpa [#allocation5], 0
    %s23 = scalar_lea.sflag [#allocation5], 1
    %24 = vsyncpa %s23, 0
    %25 = vsyncpa [#allocation7], 0
    %s26 = scalar_lea.sflag [#allocation7], 1
    %27 = vsyncpa %s26, 0
    loop: start=0, step=1, limit=4
    $region2: #{tpu_custom_call.1} parent=1 // loop_pre_header
      _
    $region3: #{tpu_custom_call.1} parent=1 // loop_header
      %s29 = sphi 0, %s33
      %p30 = scmp.ge.s32.totalorder %s29, 4
      %s39 = sphi 0, %s41
      %s42 = sphi 0, %s39
      %s43 = sphi 0, %s42
      %s59 = sphi 0, %s43
      %s63 = sphi 0, %s63
      %s65 = sphi 0, %s63
      %s66 = sphi 0, %s65
      %s80 = sphi 0, %s66
      %s84 = sphi 0, %s84
      %s86 = sphi 0, %s84
      %s87 = sphi 0, %s86
      %s101 = sphi 0, %s87
      %s105 = sphi 0, %s105
      %s107 = sphi 0, %s105
      %s108 = sphi 0, %s107
      %s122 = sphi 0, %s108
      %s126 = sphi 0, %s126
      %s128 = sphi 0, %s126
      %s129 = sphi 0, %s128
      %s143 = sphi 0, %s129
      %s147 = sphi 0, %s147
      %s149 = sphi 0, %s147
      %s150 = sphi 0, %s149
      %s164 = sphi 0, %s150
      %s168 = sphi 0, %s168
      %s170 = sphi 0, %s168
      %s171 = sphi 0, %s170
      %s185 = sphi 0, %s171
      %s189 = sphi 0, %s189
      %s191 = sphi 0, %s189
      %s192 = sphi 0, %s191
      %s206 = sphi 0, %s192
      %s210 = sphi 0, %s210
      %s212 = sphi 0, %s210
      %s213 = sphi 0, %s212
      %s227 = sphi 0, %s213
      %s231 = sphi 0, %s231
      %s233 = sphi 0, %s231
      %s234 = sphi 0, %s233
      %s248 = sphi 0, %s234
      %s252 = sphi 0, %s252
      %s254 = sphi 0, %s252
      %s255 = sphi 0, %s254
      %s269 = sphi 0, %s255
      %s273 = sphi 0, %s273
      %s275 = sphi 0, %s273
      %s276 = sphi 0, %s275
      %s290 = sphi 0, %s276
      %s294 = sphi 0, %s294
      %s296 = sphi 0, %s294
      %s297 = sphi 0, %s296
      %s311 = sphi 0, %s297
      %s317 = sphi 0, %s319
      %s320 = sphi 0, %s317
      %s321 = sphi 0, %s320
      %s337 = sphi 0, %s321
      %s343 = sphi 0, %s345
      %s346 = sphi 0, %s343
      %s347 = sphi 0, %s346
      %s363 = sphi 0, %s347
    $region4: #{tpu_custom_call.1} parent=1 // loop_header_branch
      %32 = sbr.rel (%p30) target = $region8
    $region5: #{tpu_custom_call.1} parent=1 // loop_body
      %s34 = ssub.s32 %s29, 1
      %s35 = ssub.s32 %s29, 2
      %s36 = sadd.s32 %s29, 1
      %s37 = ssub.s32 %s29, %s36
      %p38 = scmp.eq.s32.totalorder %s37, 0
      %s40 = sadd.s32 %s39, 1
      %s41 = scalar_select %p38, %s39, %s40
      %p44 = pneg %p38
      %p45 = scmp.eq.s32.totalorder %s29, 1
      %p46 = por %p44, %p45
      %p47 = scmp.ne.s32.totalorder %s39, %s42
      %p48 = scmp.eq.s32.totalorder %s29, 0
      %p49 = por %p47, %p48
      %p50 = scmp.ne.s32.totalorder %s39, %s42
      %p51 = scmp.eq.s32.totalorder %s34, 1
      %p52 = por %p50, %p51
      %p53 = scmp.ne.s32.totalorder %s42, %s43
      %p54 = scmp.eq.s32.totalorder %s34, 0
      %p55 = por %p53, %p54
      %p56 = scmp.ne.s32.totalorder %s42, %s43
      %p57 = scmp.eq.s32.totalorder %s35, 1
      %p58 = por %p56, %p57
      %p60 = scmp.ne.s32.totalorder %s43, %s59
      %p61 = scmp.eq.s32.totalorder %s35, 0
      %p62 = por %p60, %p61
      %s64 = sadd.s32 %s63, 1
      %p67 = scmp.eq.s32.totalorder %s29, 1
      %p68 = scmp.ne.s32.totalorder %s63, %s65
      %p69 = scmp.eq.s32.totalorder %s29, 0
      %p70 = por %p68, %p69
      %p71 = scmp.ne.s32.totalorder %s63, %s65
      %p72 = scmp.eq.s32.totalorder %s34, 1
      %p73 = por %p71, %p72
      %p74 = scmp.ne.s32.totalorder %s65, %s66
      %p75 = scmp.eq.s32.totalorder %s34, 0
      %p76 = por %p74, %p75
      %p77 = scmp.ne.s32.totalorder %s65, %s66
      %p78 = scmp.eq.s32.totalorder %s35, 1
      %p79 = por %p77, %p78
      %p81 = scmp.ne.s32.totalorder %s66, %s80
      %p82 = scmp.eq.s32.totalorder %s35, 0
      %p83 = por %p81, %p82
      %s85 = sadd.s32 %s84, 1
      %p88 = scmp.eq.s32.totalorder %s29, 1
      %p89 = scmp.ne.s32.totalorder %s84, %s86
      %p90 = scmp.eq.s32.totalorder %s29, 0
      %p91 = por %p89, %p90
      %p92 = scmp.ne.s32.totalorder %s84, %s86
      %p93 = scmp.eq.s32.totalorder %s34, 1
      %p94 = por %p92, %p93
      %p95 = scmp.ne.s32.totalorder %s86, %s87
      %p96 = scmp.eq.s32.totalorder %s34, 0
      %p97 = por %p95, %p96
      %p98 = scmp.ne.s32.totalorder %s86, %s87
      %p99 = scmp.eq.s32.totalorder %s35, 1
      %p100 = por %p98, %p99
      %p102 = scmp.ne.s32.totalorder %s87, %s101
      %p103 = scmp.eq.s32.totalorder %s35, 0
      %p104 = por %p102, %p103
      %s106 = sadd.s32 %s105, 1
      %p109 = scmp.eq.s32.totalorder %s29, 1
      %p110 = scmp.ne.s32.totalorder %s105, %s107
      %p111 = scmp.eq.s32.totalorder %s29, 0
      %p112 = por %p110, %p111
      %p113 = scmp.ne.s32.totalorder %s105, %s107
      %p114 = scmp.eq.s32.totalorder %s34, 1
      %p115 = por %p113, %p114
      %p116 = scmp.ne.s32.totalorder %s107, %s108
      %p117 = scmp.eq.s32.totalorder %s34, 0
      %p118 = por %p116, %p117
      %p119 = scmp.ne.s32.totalorder %s107, %s108
      %p120 = scmp.eq.s32.totalorder %s35, 1
      %p121 = por %p119, %p120
      %p123 = scmp.ne.s32.totalorder %s108, %s122
      %p124 = scmp.eq.s32.totalorder %s35, 0
      %p125 = por %p123, %p124
      %s127 = sadd.s32 %s126, 1
      %p130 = scmp.eq.s32.totalorder %s29, 1
      %p131 = scmp.ne.s32.totalorder %s126, %s128
      %p132 = scmp.eq.s32.totalorder %s29, 0
      %p133 = por %p131, %p132
      %p134 = scmp.ne.s32.totalorder %s126, %s128
      %p135 = scmp.eq.s32.totalorder %s34, 1
      %p136 = por %p134, %p135
      %p137 = scmp.ne.s32.totalorder %s128, %s129
      %p138 = scmp.eq.s32.totalorder %s34, 0
      %p139 = por %p137, %p138
      %p140 = scmp.ne.s32.totalorder %s128, %s129
      %p141 = scmp.eq.s32.totalorder %s35, 1
      %p142 = por %p140, %p141
      %p144 = scmp.ne.s32.totalorder %s129, %s143
      %p145 = scmp.eq.s32.totalorder %s35, 0
      %p146 = por %p144, %p145
      %s148 = sadd.s32 %s147, 1
      %p151 = scmp.eq.s32.totalorder %s29, 1
      %p152 = scmp.ne.s32.totalorder %s147, %s149
      %p153 = scmp.eq.s32.totalorder %s29, 0
      %p154 = por %p152, %p153
      %p155 = scmp.ne.s32.totalorder %s147, %s149
      %p156 = scmp.eq.s32.totalorder %s34, 1
      %p157 = por %p155, %p156
      %p158 = scmp.ne.s32.totalorder %s149, %s150
      %p159 = scmp.eq.s32.totalorder %s34, 0
      %p160 = por %p158, %p159
      %p161 = scmp.ne.s32.totalorder %s149, %s150
      %p162 = scmp.eq.s32.totalorder %s35, 1
      %p163 = por %p161, %p162
      %p165 = scmp.ne.s32.totalorder %s150, %s164
      %p166 = scmp.eq.s32.totalorder %s35, 0
      %p167 = por %p165, %p166
      %s169 = sadd.s32 %s168, 1
      %p172 = scmp.eq.s32.totalorder %s29, 1
      %p173 = scmp.ne.s32.totalorder %s168, %s170
      %p174 = scmp.eq.s32.totalorder %s29, 0
      %p175 = por %p173, %p174
      %p176 = scmp.ne.s32.totalorder %s168, %s170
      %p177 = scmp.eq.s32.totalorder %s34, 1
      %p178 = por %p176, %p177
      %p179 = scmp.ne.s32.totalorder %s170, %s171
      %p180 = scmp.eq.s32.totalorder %s34, 0
      %p181 = por %p179, %p180
      %p182 = scmp.ne.s32.totalorder %s170, %s171
      %p183 = scmp.eq.s32.totalorder %s35, 1
      %p184 = por %p182, %p183
      %p186 = scmp.ne.s32.totalorder %s171, %s185
      %p187 = scmp.eq.s32.totalorder %s35, 0
      %p188 = por %p186, %p187
      %s190 = sadd.s32 %s189, 1
      %p193 = scmp.eq.s32.totalorder %s29, 1
      %p194 = scmp.ne.s32.totalorder %s189, %s191
      %p195 = scmp.eq.s32.totalorder %s29, 0
      %p196 = por %p194, %p195
      %p197 = scmp.ne.s32.totalorder %s189, %s191
      %p198 = scmp.eq.s32.totalorder %s34, 1
      %p199 = por %p197, %p198
      %p200 = scmp.ne.s32.totalorder %s191, %s192
      %p201 = scmp.eq.s32.totalorder %s34, 0
      %p202 = por %p200, %p201
      %p203 = scmp.ne.s32.totalorder %s191, %s192
      %p204 = scmp.eq.s32.totalorder %s35, 1
      %p205 = por %p203, %p204
      %p207 = scmp.ne.s32.totalorder %s192, %s206
      %p208 = scmp.eq.s32.totalorder %s35, 0
      %p209 = por %p207, %p208
      %s211 = sadd.s32 %s210, 1
      %p214 = scmp.eq.s32.totalorder %s29, 1
      %p215 = scmp.ne.s32.totalorder %s210, %s212
      %p216 = scmp.eq.s32.totalorder %s29, 0
      %p217 = por %p215, %p216
      %p218 = scmp.ne.s32.totalorder %s210, %s212
      %p219 = scmp.eq.s32.totalorder %s34, 1
      %p220 = por %p218, %p219
      %p221 = scmp.ne.s32.totalorder %s212, %s213
      %p222 = scmp.eq.s32.totalorder %s34, 0
      %p223 = por %p221, %p222
      %p224 = scmp.ne.s32.totalorder %s212, %s213
      %p225 = scmp.eq.s32.totalorder %s35, 1
      %p226 = por %p224, %p225
      %p228 = scmp.ne.s32.totalorder %s213, %s227
      %p229 = scmp.eq.s32.totalorder %s35, 0
      %p230 = por %p228, %p229
      %s232 = sadd.s32 %s231, 1
      %p235 = scmp.eq.s32.totalorder %s29, 1
      %p236 = scmp.ne.s32.totalorder %s231, %s233
      %p237 = scmp.eq.s32.totalorder %s29, 0
      %p238 = por %p236, %p237
      %p239 = scmp.ne.s32.totalorder %s231, %s233
      %p240 = scmp.eq.s32.totalorder %s34, 1
      %p241 = por %p239, %p240
      %p242 = scmp.ne.s32.totalorder %s233, %s234
      %p243 = scmp.eq.s32.totalorder %s34, 0
      %p244 = por %p242, %p243
      %p245 = scmp.ne.s32.totalorder %s233, %s234
      %p246 = scmp.eq.s32.totalorder %s35, 1
      %p247 = por %p245, %p246
      %p249 = scmp.ne.s32.totalorder %s234, %s248
      %p250 = scmp.eq.s32.totalorder %s35, 0
      %p251 = por %p249, %p250
      %s253 = sadd.s32 %s252, 1
      %p256 = scmp.eq.s32.totalorder %s29, 1
      %p257 = scmp.ne.s32.totalorder %s252, %s254
      %p258 = scmp.eq.s32.totalorder %s29, 0
      %p259 = por %p257, %p258
      %p260 = scmp.ne.s32.totalorder %s252, %s254
      %p261 = scmp.eq.s32.totalorder %s34, 1
      %p262 = por %p260, %p261
      %p263 = scmp.ne.s32.totalorder %s254, %s255
      %p264 = scmp.eq.s32.totalorder %s34, 0
      %p265 = por %p263, %p264
      %p266 = scmp.ne.s32.totalorder %s254, %s255
      %p267 = scmp.eq.s32.totalorder %s35, 1
      %p268 = por %p266, %p267
      %p270 = scmp.ne.s32.totalorder %s255, %s269
      %p271 = scmp.eq.s32.totalorder %s35, 0
      %p272 = por %p270, %p271
      %s274 = sadd.s32 %s273, 1
      %p277 = scmp.eq.s32.totalorder %s29, 1
      %p278 = scmp.ne.s32.totalorder %s273, %s275
      %p279 = scmp.eq.s32.totalorder %s29, 0
      %p280 = por %p278, %p279
      %p281 = scmp.ne.s32.totalorder %s273, %s275
      %p282 = scmp.eq.s32.totalorder %s34, 1
      %p283 = por %p281, %p282
      %p284 = scmp.ne.s32.totalorder %s275, %s276
      %p285 = scmp.eq.s32.totalorder %s34, 0
      %p286 = por %p284, %p285
      %p287 = scmp.ne.s32.totalorder %s275, %s276
      %p288 = scmp.eq.s32.totalorder %s35, 1
      %p289 = por %p287, %p288
      %p291 = scmp.ne.s32.totalorder %s276, %s290
      %p292 = scmp.eq.s32.totalorder %s35, 0
      %p293 = por %p291, %p292
      %s295 = sadd.s32 %s294, 1
      %p298 = scmp.eq.s32.totalorder %s29, 1
      %p299 = scmp.ne.s32.totalorder %s294, %s296
      %p300 = scmp.eq.s32.totalorder %s29, 0
      %p301 = por %p299, %p300
      %p302 = scmp.ne.s32.totalorder %s294, %s296
      %p303 = scmp.eq.s32.totalorder %s34, 1
      %p304 = por %p302, %p303
      %p305 = scmp.ne.s32.totalorder %s296, %s297
      %p306 = scmp.eq.s32.totalorder %s34, 0
      %p307 = por %p305, %p306
      %p308 = scmp.ne.s32.totalorder %s296, %s297
      %p309 = scmp.eq.s32.totalorder %s35, 1
      %p310 = por %p308, %p309
      %p312 = scmp.ne.s32.totalorder %s297, %s311
      %p313 = scmp.eq.s32.totalorder %s35, 0
      %p314 = por %p312, %p313
      %s315 = ssub.s32 %s29, %s36
      %p316 = scmp.eq.s32.totalorder %s315, 0
      %s318 = sadd.s32 %s317, 1
      %s319 = scalar_select %p316, %s317, %s318
      %p322 = pneg %p316
      %p323 = scmp.eq.s32.totalorder %s29, 1
      %p324 = por %p322, %p323
      %p325 = scmp.ne.s32.totalorder %s317, %s320
      %p326 = scmp.eq.s32.totalorder %s29, 0
      %p327 = por %p325, %p326
      %p328 = scmp.ne.s32.totalorder %s317, %s320
      %p329 = scmp.eq.s32.totalorder %s34, 1
      %p330 = por %p328, %p329
      %p331 = scmp.ne.s32.totalorder %s320, %s321
      %p332 = scmp.eq.s32.totalorder %s34, 0
      %p333 = por %p331, %p332
      %p334 = scmp.ne.s32.totalorder %s320, %s321
      %p335 = scmp.eq.s32.totalorder %s35, 1
      %p336 = por %p334, %p335
      %p338 = scmp.ne.s32.totalorder %s321, %s337
      %p339 = scmp.eq.s32.totalorder %s35, 0
      %p340 = por %p338, %p339
      %s341 = ssub.s32 %s29, %s36
      %p342 = scmp.eq.s32.totalorder %s341, 0
      %s344 = sadd.s32 %s343, 1
      %s345 = scalar_select %p342, %s343, %s344
      %p348 = pneg %p342
      %p349 = scmp.eq.s32.totalorder %s29, 1
      %p350 = por %p348, %p349
      %p351 = scmp.ne.s32.totalorder %s343, %s346
      %p352 = scmp.eq.s32.totalorder %s29, 0
      %p353 = por %p351, %p352
      %p354 = scmp.ne.s32.totalorder %s343, %s346
      %p355 = scmp.eq.s32.totalorder %s34, 1
      %p356 = por %p354, %p355
      %p357 = scmp.ne.s32.totalorder %s346, %s347
      %p358 = scmp.eq.s32.totalorder %s34, 0
      %p359 = por %p357, %p358
      %p360 = scmp.ne.s32.totalorder %s346, %s347
      %p361 = scmp.eq.s32.totalorder %s35, 1
      %p362 = por %p360, %p361
      %p364 = scmp.ne.s32.totalorder %s347, %s363
      %p365 = scmp.eq.s32.totalorder %s35, 0
      %p366 = por %p364, %p365
      %p367 = scmp.le.s32.totalorder 1, %s29
      %p368 = scmp.lt.s32.totalorder %s29, 3
      %p369 = pnand %p367, %p368
      %p370 = pneg %p369
      // Predicated region
      $region9: #{tpu_custom_call.1} parent=5 // pred_check
        _
      $region10: #{tpu_custom_call.1} parent=5 // pred_check_branch
        %372 = sbr.rel (%p369) target = $region12
      $region11: #{tpu_custom_call.1} parent=5 // pred_region
        %s373 = ssub.s32 %s29, 1
        // Predicated region
        $region13: #{tpu_custom_call.1} parent=11 // pred_check
          %p374 = pneg %p76
        $region14: #{tpu_custom_call.1} parent=11 // pred_check_branch
          %376 = sbr.rel (%p374) target = $region16
        $region15: #{tpu_custom_call.1} parent=11 // pred_region
          _
        $region16: #{tpu_custom_call.1} parent=11 // pred_fallthru
          _
        // Predicated region
        $region17: #{tpu_custom_call.1} parent=11 // pred_check
          %p377 = pneg %p97
        $region18: #{tpu_custom_call.1} parent=11 // pred_check_branch
          %379 = sbr.rel (%p377) target = $region20
        $region19: #{tpu_custom_call.1} parent=11 // pred_region
          _
        $region20: #{tpu_custom_call.1} parent=11 // pred_fallthru
          _
        // Predicated region
        $region21: #{tpu_custom_call.1} parent=11 // pred_check
          %p380 = pneg %p118
        $region22: #{tpu_custom_call.1} parent=11 // pred_check_branch
          %382 = sbr.rel (%p380) target = $region24
        $region23: #{tpu_custom_call.1} parent=11 // pred_region
          _
        $region24: #{tpu_custom_call.1} parent=11 // pred_fallthru
          _
        // Predicated region
        $region25: #{tpu_custom_call.1} parent=11 // pred_check
          %p383 = pneg %p139
        $region26: #{tpu_custom_call.1} parent=11 // pred_check_branch
          %385 = sbr.rel (%p383) target = $region28
        $region27: #{tpu_custom_call.1} parent=11 // pred_region
          _
        $region28: #{tpu_custom_call.1} parent=11 // pred_fallthru
          _
        // Predicated region
        $region29: #{tpu_custom_call.1} parent=11 // pred_check
          %p386 = pneg %p160
        $region30: #{tpu_custom_call.1} parent=11 // pred_check_branch
          %388 = sbr.rel (%p386) target = $region32
        $region31: #{tpu_custom_call.1} parent=11 // pred_region
          _
        $region32: #{tpu_custom_call.1} parent=11 // pred_fallthru
          _
        // Predicated region
        $region33: #{tpu_custom_call.1} parent=11 // pred_check
          %p389 = pneg %p181
        $region34: #{tpu_custom_call.1} parent=11 // pred_check_branch
          %391 = sbr.rel (%p389) target = $region36
        $region35: #{tpu_custom_call.1} parent=11 // pred_region
          _
        $region36: #{tpu_custom_call.1} parent=11 // pred_fallthru
          _
        // Predicated region
        $region37: #{tpu_custom_call.1} parent=11 // pred_check
          %p392 = pneg %p202
        $region38: #{tpu_custom_call.1} parent=11 // pred_check_branch
          %394 = sbr.rel (%p392) target = $region40
        $region39: #{tpu_custom_call.1} parent=11 // pred_region
          _
        $region40: #{tpu_custom_call.1} parent=11 // pred_fallthru
          _
        // Predicated region
        $region41: #{tpu_custom_call.1} parent=11 // pred_check
          %p395 = pneg %p223
        $region42: #{tpu_custom_call.1} parent=11 // pred_check_branch
          %397 = sbr.rel (%p395) target = $region44
        $region43: #{tpu_custom_call.1} parent=11 // pred_region
          _
        $region44: #{tpu_custom_call.1} parent=11 // pred_fallthru
          _
        // Predicated region
        $region45: #{tpu_custom_call.1} parent=11 // pred_check
          %p398 = pneg %p244
        $region46: #{tpu_custom_call.1} parent=11 // pred_check_branch
          %400 = sbr.rel (%p398) target = $region48
        $region47: #{tpu_custom_call.1} parent=11 // pred_region
          _
        $region48: #{tpu_custom_call.1} parent=11 // pred_fallthru
          _
        // Predicated region
        $region49: #{tpu_custom_call.1} parent=11 // pred_check
          %p401 = pneg %p265
        $region50: #{tpu_custom_call.1} parent=11 // pred_check_branch
          %403 = sbr.rel (%p401) target = $region52
        $region51: #{tpu_custom_call.1} parent=11 // pred_region
          _
        $region52: #{tpu_custom_call.1} parent=11 // pred_fallthru
          _
        // Predicated region
        $region53: #{tpu_custom_call.1} parent=11 // pred_check
          %p404 = pneg %p286
        $region54: #{tpu_custom_call.1} parent=11 // pred_check_branch
          %406 = sbr.rel (%p404) target = $region56
        $region55: #{tpu_custom_call.1} parent=11 // pred_region
          _
        $region56: #{tpu_custom_call.1} parent=11 // pred_fallthru
          _
        // Predicated region
        $region57: #{tpu_custom_call.1} parent=11 // pred_check
          %p407 = pneg %p307
        $region58: #{tpu_custom_call.1} parent=11 // pred_check_branch
          %409 = sbr.rel (%p407) target = $region60
        $region59: #{tpu_custom_call.1} parent=11 // pred_region
          _
        $region60: #{tpu_custom_call.1} parent=11 // pred_fallthru
          _
      $region12: #{tpu_custom_call.1} parent=5 // pred_fallthru
        _
      %p410 = scmp.lt.s32.totalorder %s29, 2
      // Predicated region
      $region61: #{tpu_custom_call.1} parent=5 // pred_check
        %p411 = pneg %p410
      $region62: #{tpu_custom_call.1} parent=5 // pred_check_branch
        %413 = sbr.rel (%p411) target = $region64
      $region63: #{tpu_custom_call.1} parent=5 // pred_region
        // Predicated region
        $region65: #{tpu_custom_call.1} parent=63 // pred_check
          %p414 = pneg %p49
        $region66: #{tpu_custom_call.1} parent=63 // pred_check_branch
          %416 = sbr.rel (%p414) target = $region68
        $region67: #{tpu_custom_call.1} parent=63 // pred_region
          %p417 = scmp.lt.s32.totalorder %s29, 1
          %s418 = scalar_select %p417, %s29, 1
          %s419 = smul.addr %s418, 2
          %s420 = smul.addr %s419, 4
          %s421 = scalar_lea.vmem %s0, %s420
        $region68: #{tpu_custom_call.1} parent=63 // pred_fallthru
          _
      $region64: #{tpu_custom_call.1} parent=5 // pred_fallthru
        _
      %p422 = scmp.le.s32.totalorder 1, %s29
      %p423 = scmp.lt.s32.totalorder %s29, 3
      %p424 = pnand %p422, %p423
      %p425 = pneg %p424
      // Predicated region
      $region69: #{tpu_custom_call.1} parent=5 // pred_check
        _
      $region70: #{tpu_custom_call.1} parent=5 // pred_check_branch
        %427 = sbr.rel (%p424) target = $region72
      $region71: #{tpu_custom_call.1} parent=5 // pred_region
        %s428 = ssub.s32 %s29, 1
        %p429 = scmp.lt.s32.totalorder %s34, 1
        %s430 = scalar_select %p429, %s34, 1
        %s431 = smul.addr %s430, 2
        %s432 = smul.addr %s431, 4
        %s433 = scalar_lea.vmem %s0, %s432
        %p434 = pneg %p55
        %p435 = pneg %p52
        %p436 = pneg %p76
        %p437 = pneg %p73
        %p438 = pneg %p97
        %p439 = pneg %p94
        %p440 = pneg %p118
        %p441 = pneg %p115
        %p442 = pneg %p139
        %p443 = pneg %p136
        %p444 = pneg %p160
        %p445 = pneg %p157
        %p446 = pneg %p181
        %p447 = pneg %p178
        %p448 = pneg %p202
        %p449 = pneg %p199
        %p450 = pneg %p223
        %p451 = pneg %p220
        %p452 = pneg %p244
        %p453 = pneg %p241
        %p454 = pneg %p265
        %p455 = pneg %p262
        %p456 = pneg %p286
        %p457 = pneg %p283
        %p458 = pneg %p307
        %p459 = pneg %p304
        %p460 = pneg %p333
        %p461 = pneg %p330
        %s462 = sand.u32 %s320, 1
        %s463 = scalar_lea.sflag [#allocation5], %s462
        %s464 = sand.u32 %s320, 1
        %s465 = smul.addr %s464, 16
        %s466 = scalar_lea.vmem [#allocation4], %s465
        %p467 = pneg %p359
        %p468 = pneg %p356
        %s469 = sand.u32 %s346, 1
        %s470 = scalar_lea.sflag [#allocation7], %s469
        %s471 = sand.u32 %s346, 1
        %s472 = smul.addr %s471, 16
        %s473 = scalar_lea.vmem [#allocation6], %s472
        %p474 = scmp.lt.s32.totalorder %s34, 1
        %s475 = scalar_select %p474, %s34, 1
        %s476 = smul.addr %s475, 2
        %s477 = smul.addr %s476, 4
        %s478 = scalar_lea.vmem %s0, %s477
        %v480 = vld [vmem:[%s478] sm:$0xf]
        %v481 = vld [vmem:[%s478 + $0x4] sm:$0xf]
        %v482 = vlaneseq
        %v483 = vand.u32 %v482, 127
        %s484 = sld [smem:[#allocation2]]
        %s485 = sld [smem:[#allocation3]]
        %v486 = vld [vmem:[%s1] sm:$0xf]
        %v487 = vld [vmem:[%s1 + $0x4] sm:$0xf]
        %v488 = vld [vmem:[%s1 + $0x8] sm:$0xf]
        %v489 = vld [vmem:[%s1 + $0xc] sm:$0xf]
        %v490 = vld [vmem:[%s2] sm:$0xff]
        %v491 = vld [vmem:[%s2 + $0x8] sm:$0xff]
        %v492 = vld [vmem:[%s2 + $0x10] sm:$0xff]
        %v493 = vld [vmem:[%s2 + $0x18] sm:$0xff]
        %495 = vset.pattern.permute.xlu0 0
        %496 = vperm.xlu0 %495, %v490
        %v497 = vpop.permute.xlu0 %496
        %500 = vset.pattern.permute.xlu0 0
        %501 = vperm.xlu0 %500, %v491
        %v502 = vpop.permute.xlu0 %501
        %505 = vset.pattern.permute.xlu0 0
        %506 = vperm.xlu0 %505, %v492
        %v507 = vpop.permute.xlu0 %506
        %510 = vset.pattern.permute.xlu0 0
        %511 = vperm.xlu0 %510, %v493
        %v512 = vpop.permute.xlu0 %511
        %v518 = vunpack.c.l.b16 %v486
        %v519 = vunpack.c.l.b16 %v487
        %v520 = vunpack.c.l.b16 %v488
        %v521 = vunpack.c.l.b16 %v489
        %v522 = vpack.c.b16 %v519, %v518
        %v523 = vpack.c.b16 %v521, %v520
        %v526 = vunpack.c.l.b16 %v480
        %v527 = vunpack.c.l.b16 %v481
        %v528 = vpack.c.b16 %v527, %v526
        %vm530 = vcmask 130048
        %v532 = vsel %vm530, %v522, 0
        %v535 = vsel %vm530, %v523, 0
        %537 = vmatpush.bf16.msra.mxu0 0
        %538 = vmatpush.bf16.msra.mxu0 0
        %539 = vmatpush.bf16.msra.mxu0 0
        %540 = vmatpush.bf16.msra.mxu0 0
        %541 = vmatpush.bf16.msra.mxu0 0
        %542 = vmatpush.bf16.msra.mxu0 0
        %543 = vmatpush.bf16.msra.mxu0 0
        %544 = vmatpush.bf16.msra.mxu0 %v528
        %545 = vmatmul.bf16.gmra.mxu0 %v532
        %v546 = vpop.f32.mrf.mxu0
        %v547 = vadd.f32 %v497, %v546
        %v548 = vpop.f32.mrf.mxu0
        %v549 = vadd.f32 %v502, %v548
        %550 = vmatmul.bf16.gmra.mxu0 %v535
        %v551 = vpop.f32.mrf.mxu0
        %v552 = vadd.f32 %v507, %v551
        %v553 = vpop.f32.mrf.mxu0
        %v554 = vadd.f32 %v512, %v553
        %555 = vdwg.mxu0
        %vm556 = vcmp.ge.f32.partialorder %v547, 0.0
        %vm557 = vcmp.ge.f32.partialorder %v549, 0.0
        %vm558 = vcmp.ge.f32.partialorder %v552, 0.0
        %vm559 = vcmp.ge.f32.partialorder %v554, 0.0
        %v560 = vstv %s484
        %v561 = vmul.f32 %v560, %v547
        %v562 = vmul.f32 %v560, %v549
        %v563 = vmul.f32 %v560, %v552
        %v564 = vmul.f32 %v560, %v554
        %v565 = vsel %vm556, %v547, %v561
        %v566 = vsel %vm557, %v549, %v562
        %v567 = vsel %vm558, %v552, %v563
        %v568 = vsel %vm559, %v554, %v564
        %v569 = vadd.f32 %v565, %v566
        %v570 = vadd.f32 %v569, %v567
        %v571 = vadd.f32 %v570, %v568
        %572 = vadd.xlane.f32.xlu0 %v571
        %v573 = vpop.xlane.xlu0 %572
        %v574 = vrot.slane %v573, 4
        %v575 = vadd.f32 %v573, %v574
        %v576 = vrot.slane %v575, 2
        %v577 = vadd.f32 %v575, %v576
        %v578 = vrot.slane %v577, 1
        %v579 = vadd.f32 %v577, %v578
        %s580 = vtos %v579
        %s581 = smul.f32 %s580, 0.00024414063
        %v582 = vmul.f32 %v565, %v565
        %v583 = vmul.f32 %v566, %v566
        %v584 = vmul.f32 %v567, %v567
        %v585 = vmul.f32 %v568, %v568
        %v586 = vadd.f32 %v582, %v583
        %v587 = vadd.f32 %v586, %v584
        %v588 = vadd.f32 %v587, %v585
        %589 = vadd.xlane.f32.xlu0 %v588
        %v590 = vpop.xlane.xlu0 %589
        %v591 = vrot.slane %v590, 4
        %v592 = vadd.f32 %v590, %v591
        %v593 = vrot.slane %v592, 2
        %v594 = vadd.f32 %v592, %v593
        %v595 = vrot.slane %v594, 1
        %v596 = vadd.f32 %v594, %v595
        %s597 = vtos %v596
        %s598 = smul.f32 %s597, 0.00024414063
        %s599 = smul.f32 %s581, %s581
        %s600 = ssub.f32 %s598, %s599
        %s601 = smax.f32 %s600, 0.0
        %s602 = sadd.f32 %s601, 1e-08
        %v603 = vstv %s602
        %v604 = vrsqrt.pop %v603
        %v605 = vmul.f32 %v604, %v603
        %v606 = vmul.f32 %v605, %v604
        %v607 = vmul.f32 0.5, %v606
        %v608 = vsub.f32 1.5, %v607
        %v609 = vmul.f32 %v604, %v608
        %vm610 = vweird.f32 %v603
        %vm611 = vweird.f32 %v604
        %vm612 = vmor %vm610, %vm611
        %v613 = vsel %vm612, %v604, %v609
        %s614 = vtos %v613
        %v615 = vld [vmem:[%s4] sm:$0xff]
        %v616 = vld [vmem:[%s4 + $0x8] sm:$0xff]
        %v617 = vld [vmem:[%s4 + $0x10] sm:$0xff]
        %v618 = vld [vmem:[%s4 + $0x18] sm:$0xff]
        %v619 = vstv %s614
        %v620 = vmul.f32 %v615, %v619
        %v621 = vmul.f32 %v616, %v619
        %v622 = vmul.f32 %v617, %v619
        %v623 = vmul.f32 %v618, %v619
        %v624 = vld [vmem:[%s5] sm:$0xff]
        %v625 = vld [vmem:[%s5 + $0x8] sm:$0xff]
        %v626 = vld [vmem:[%s5 + $0x10] sm:$0xff]
        %v627 = vld [vmem:[%s5 + $0x18] sm:$0xff]
        %v628 = vstv %s581
        %v629 = vmul.f32 %v628, %v620
        %v630 = vmul.f32 %v628, %v621
        %v631 = vmul.f32 %v628, %v622
        %v632 = vmul.f32 %v628, %v623
        %v633 = vsub.f32 %v624, %v629
        %v634 = vsub.f32 %v625, %v630
        %v635 = vsub.f32 %v626, %v631
        %v636 = vsub.f32 %v627, %v632
        %v637 = vld [vmem:[%s6] sm:$0xff]
        %v638 = vld [vmem:[%s6 + $0x8] sm:$0xff]
        %v639 = vld [vmem:[%s6 + $0x10] sm:$0xff]
        %v640 = vld [vmem:[%s6 + $0x18] sm:$0xff]
        %642 = vset.pattern.permute.xlu0 0
        %643 = vperm.xlu0 %642, %v620
        %v644 = vpop.permute.xlu0 %643
        %647 = vset.pattern.permute.xlu0 0
        %648 = vperm.xlu0 %647, %v621
        %v649 = vpop.permute.xlu0 %648
        %652 = vset.pattern.permute.xlu0 0
        %653 = vperm.xlu0 %652, %v622
        %v654 = vpop.permute.xlu0 %653
        %657 = vset.pattern.permute.xlu0 0
        %658 = vperm.xlu0 %657, %v623
        %v659 = vpop.permute.xlu0 %658
        %v661 = vmul.f32 %v637, %v644
        %v662 = vmul.f32 %v638, %v649
        %v663 = vmul.f32 %v639, %v654
        %v664 = vmul.f32 %v640, %v659
        %666 = vset.pattern.permute.xlu0 0
        %667 = vperm.xlu0 %666, %v633
        %v668 = vpop.permute.xlu0 %667
        %671 = vset.pattern.permute.xlu0 0
        %672 = vperm.xlu0 %671, %v634
        %v673 = vpop.permute.xlu0 %672
        %676 = vset.pattern.permute.xlu0 0
        %677 = vperm.xlu0 %676, %v635
        %v678 = vpop.permute.xlu0 %677
        %681 = vset.pattern.permute.xlu0 0
        %682 = vperm.xlu0 %681, %v636
        %v683 = vpop.permute.xlu0 %682
        %v685 = vmul.f32 %v637, %v668
        %v686 = vmul.f32 %v638, %v673
        %v687 = vmul.f32 %v639, %v678
        %v688 = vmul.f32 %v640, %v683
        %v689 = vld [vmem:[%s7] sm:$0xff]
        %v690 = vld [vmem:[%s7 + $0x8] sm:$0xff]
        %v691 = vld [vmem:[%s7 + $0x10] sm:$0xff]
        %v692 = vld [vmem:[%s7 + $0x18] sm:$0xff]
        %vm693 = vcmask 23552
        %v694 = vsel %vm693, %v685, 0.0
        %695 = vadd.xlane.f32.xlu0 %v694
        %v696 = vpop.xlane.xlu0 %695
        %v697 = vsel %vm693, %v686, 0.0
        %698 = vadd.xlane.f32.xlu0 %v697
        %v699 = vpop.xlane.xlu0 %698
        %v700 = vsel %vm693, %v687, 0.0
        %701 = vadd.xlane.f32.xlu0 %v700
        %v702 = vpop.xlane.xlu0 %701
        %v703 = vsel %vm693, %v688, 0.0
        %704 = vadd.xlane.f32.xlu0 %v703
        %v705 = vpop.xlane.xlu0 %704
        %v706 = vadd.f32 %v689, %v696
        %v707 = vadd.f32 %v690, %v699
        %v708 = vadd.f32 %v691, %v702
        %v709 = vadd.f32 %v692, %v705
        %vm710 = vcmp.ge.s32.totalorder %v483, 2
        %vm711 = vcmp.lt.s32.totalorder %v483, 126
        %712 = vrot.lane.b32.xlu0 %v565, 2
        %v713 = vpop.permute.xlu0 %712
        %714 = vrot.lane.b32.xlu0 %v566, 2
        %v715 = vpop.permute.xlu0 %714
        %716 = vrot.lane.b32.xlu0 %v567, 2
        %v717 = vpop.permute.xlu0 %716
        %718 = vrot.lane.b32.xlu0 %v568, 2
        %v719 = vpop.permute.xlu0 %718
        %721 = vset.pattern.permute.xlu0 0
        %722 = vperm.xlu0 %721, %v661
        %v723 = vpop.permute.xlu0 %722
        %726 = vset.pattern.permute.xlu0 0
        %727 = vperm.xlu0 %726, %v662
        %v728 = vpop.permute.xlu0 %727
        %731 = vset.pattern.permute.xlu0 0
        %732 = vperm.xlu0 %731, %v663
        %v733 = vpop.permute.xlu0 %732
        %736 = vset.pattern.permute.xlu0 0
        %737 = vperm.xlu0 %736, %v664
        %v738 = vpop.permute.xlu0 %737
        %v740 = vmul.f32 %v723, %v713
        %v741 = vmul.f32 %v728, %v715
        %v742 = vmul.f32 %v733, %v717
        %v743 = vmul.f32 %v738, %v719
        %v744 = vsub.f32 0.0, %v685
        %v745 = vsub.f32 0.0, %v686
        %v746 = vsub.f32 0.0, %v687
        %v747 = vsub.f32 0.0, %v688
        %v748 = vsel %vm710, 1, 0
        %vm749 = vcmp.eq.s32.totalorder %v748, 1
        %751 = vset.pattern.permute.xlu0 0
        %752 = vperm.xlu0 %751, %v744
        %v753 = vpop.permute.xlu0 %752
        %756 = vset.pattern.permute.xlu0 0
        %757 = vperm.xlu0 %756, %v745
        %v758 = vpop.permute.xlu0 %757
        %761 = vset.pattern.permute.xlu0 0
        %762 = vperm.xlu0 %761, %v746
        %v763 = vpop.permute.xlu0 %762
        %766 = vset.pattern.permute.xlu0 0
        %767 = vperm.xlu0 %766, %v747
        %v768 = vpop.permute.xlu0 %767
        %v770 = vsel %vm749, %v740, %v753
        %v771 = vsel %vm749, %v741, %v758
        %v772 = vsel %vm749, %v742, %v763
        %v773 = vsel %vm749, %v743, %v768
        %774 = vset.pattern.permute.xlu0 1
        %775 = vperm.xlu0 %774, %v661
        %v776 = vpop.permute.xlu0 %775
        %778 = vset.pattern.permute.xlu0 1
        %779 = vperm.xlu0 %778, %v662
        %v780 = vpop.permute.xlu0 %779
        %782 = vset.pattern.permute.xlu0 1
        %783 = vperm.xlu0 %782, %v663
        %v784 = vpop.permute.xlu0 %783
        %786 = vset.pattern.permute.xlu0 1
        %787 = vperm.xlu0 %786, %v664
        %v788 = vpop.permute.xlu0 %787
        %v790 = vmul.f32 %v776, %v565
        %v791 = vmul.f32 %v780, %v566
        %v792 = vmul.f32 %v784, %v567
        %v793 = vmul.f32 %v788, %v568
        %v794 = vadd.f32 %v770, %v790
        %v795 = vadd.f32 %v771, %v791
        %v796 = vadd.f32 %v772, %v792
        %v797 = vadd.f32 %v773, %v793
        %798 = vrot.lane.b32.xlu0 %v565, 126
        %v799 = vpop.permute.xlu0 %798
        %800 = vrot.lane.b32.xlu0 %v566, 126
        %v801 = vpop.permute.xlu0 %800
        %802 = vrot.lane.b32.xlu0 %v567, 126
        %v803 = vpop.permute.xlu0 %802
        %804 = vrot.lane.b32.xlu0 %v568, 126
        %v805 = vpop.permute.xlu0 %804
        %806 = vset.pattern.permute.xlu0 2
        %807 = vperm.xlu0 %806, %v661
        %v808 = vpop.permute.xlu0 %807
        %810 = vset.pattern.permute.xlu0 2
        %811 = vperm.xlu0 %810, %v662
        %v812 = vpop.permute.xlu0 %811
        %814 = vset.pattern.permute.xlu0 2
        %815 = vperm.xlu0 %814, %v663
        %v816 = vpop.permute.xlu0 %815
        %818 = vset.pattern.permute.xlu0 2
        %819 = vperm.xlu0 %818, %v664
        %v820 = vpop.permute.xlu0 %819
        %v822 = vmul.f32 %v808, %v799
        %v823 = vmul.f32 %v812, %v801
        %v824 = vmul.f32 %v816, %v803
        %v825 = vmul.f32 %v820, %v805
        %v826 = vsel %vm711, 1, 0
        %vm827 = vcmp.eq.s32.totalorder %v826, 1
        %828 = vset.pattern.permute.xlu0 2
        %829 = vperm.xlu0 %828, %v744
        %v830 = vpop.permute.xlu0 %829
        %832 = vset.pattern.permute.xlu0 2
        %833 = vperm.xlu0 %832, %v745
        %v834 = vpop.permute.xlu0 %833
        %836 = vset.pattern.permute.xlu0 2
        %837 = vperm.xlu0 %836, %v746
        %v838 = vpop.permute.xlu0 %837
        %840 = vset.pattern.permute.xlu0 2
        %841 = vperm.xlu0 %840, %v747
        %v842 = vpop.permute.xlu0 %841
        %v844 = vsel %vm827, %v822, %v830
        %v845 = vsel %vm827, %v823, %v834
        %v846 = vsel %vm827, %v824, %v838
        %v847 = vsel %vm827, %v825, %v842
        %v848 = vadd.f32 %v794, %v844
        %v849 = vadd.f32 %v795, %v845
        %v850 = vadd.f32 %v796, %v846
        %v851 = vadd.f32 %v797, %v847
        %853 = vset.pattern.permute.xlu0 0
        %854 = vperm.xlu0 %853, %v706
        %v855 = vpop.permute.xlu0 %854
        %858 = vset.pattern.permute.xlu0 0
        %859 = vperm.xlu0 %858, %v707
        %v860 = vpop.permute.xlu0 %859
        %863 = vset.pattern.permute.xlu0 0
        %864 = vperm.xlu0 %863, %v708
        %v865 = vpop.permute.xlu0 %864
        %868 = vset.pattern.permute.xlu0 0
        %869 = vperm.xlu0 %868, %v709
        %v870 = vpop.permute.xlu0 %869
        %v872 = vadd.f32 %v848, %v855
        %v873 = vadd.f32 %v849, %v860
        %v874 = vadd.f32 %v850, %v865
        %v875 = vadd.f32 %v851, %v870
        %vm876 = vcmp.ge.f32.partialorder %v872, 0.0
        %vm877 = vcmp.ge.f32.partialorder %v873, 0.0
        %vm878 = vcmp.ge.f32.partialorder %v874, 0.0
        %vm879 = vcmp.ge.f32.partialorder %v875, 0.0
        %v880 = vstv %s485
        %v881 = vmul.f32 %v880, %v872
        %v882 = vmul.f32 %v880, %v873
        %v883 = vmul.f32 %v880, %v874
        %v884 = vmul.f32 %v880, %v875
        %v885 = vsel %vm876, %v872, %v881
        %v886 = vsel %vm877, %v873, %v882
        %v887 = vsel %vm878, %v874, %v883
        %v888 = vsel %vm879, %v875, %v884
        %v889 = vadd.f32 %v885, %v886
        %v890 = vadd.f32 %v889, %v887
        %v891 = vadd.f32 %v890, %v888
        %892 = vadd.xlane.f32.xlu0 %v891
        %v893 = vpop.xlane.xlu0 %892
        %v894 = vrot.slane %v893, 4
        %v895 = vadd.f32 %v893, %v894
        %v896 = vrot.slane %v895, 2
        %v897 = vadd.f32 %v895, %v896
        %v898 = vrot.slane %v897, 1
        %v899 = vadd.f32 %v897, %v898
        %s900 = vtos %v899
        %s901 = smul.f32 %s900, 0.00024414063
        %v902 = vmul.f32 %v885, %v885
        %v903 = vmul.f32 %v886, %v886
        %v904 = vmul.f32 %v887, %v887
        %v905 = vmul.f32 %v888, %v888
        %v906 = vadd.f32 %v902, %v903
        %v907 = vadd.f32 %v906, %v904
        %v908 = vadd.f32 %v907, %v905
        %909 = vadd.xlane.f32.xlu0 %v908
        %v910 = vpop.xlane.xlu0 %909
        %v911 = vrot.slane %v910, 4
        %v912 = vadd.f32 %v910, %v911
        %v913 = vrot.slane %v912, 2
        %v914 = vadd.f32 %v912, %v913
        %v915 = vrot.slane %v914, 1
        %v916 = vadd.f32 %v914, %v915
        %s917 = vtos %v916
        %s918 = smul.f32 %s917, 0.00024414063
        %s919 = smul.f32 %s901, %s901
        %s920 = ssub.f32 %s918, %s919
        %s921 = smax.f32 %s920, 0.0
        %s922 = sadd.f32 %s921, 1e-08
        %v923 = vstv %s922
        %v924 = vrsqrt.pop %v923
        %v925 = vmul.f32 %v924, %v923
        %v926 = vmul.f32 %v925, %v924
        %v927 = vmul.f32 0.5, %v926
        %v928 = vsub.f32 1.5, %v927
        %v929 = vmul.f32 %v924, %v928
        %vm930 = vweird.f32 %v923
        %vm931 = vweird.f32 %v924
        %vm932 = vmor %vm930, %vm931
        %v933 = vsel %vm932, %v924, %v929
        %s934 = vtos %v933
        %v935 = vld [vmem:[%s9] sm:$0x1]
        %v936 = vstv %s934
        %v937 = vmul.f32 %v935, %v936
        %v938 = vld [vmem:[%s10] sm:$0x1]
        %v939 = vstv %s901
        %v940 = vmul.f32 %v939, %v937
        %v941 = vsub.f32 %v938, %v940
        %v942 = vld [vmem:[%s11] sm:$0xff]
        %v943 = vld [vmem:[%s11 + $0x8] sm:$0xff]
        %v944 = vld [vmem:[%s11 + $0x10] sm:$0xff]
        %v945 = vld [vmem:[%s11 + $0x18] sm:$0xff]
        %v947 = vperm.slane %v937, 0
        %v949 = vmul.f32 %v942, %v947
        %v950 = vmul.f32 %v943, %v947
        %v951 = vmul.f32 %v944, %v947
        %v952 = vmul.f32 %v945, %v947
        %v953 = vpack.c.bf16 %v950, %v949
        %v954 = vpack.c.bf16 %v952, %v951
        %v955 = vld [vmem:[%s12] sm:$0xff]
        %v956 = vld [vmem:[%s12 + $0x8] sm:$0xff]
        %v957 = vld [vmem:[%s12 + $0x10] sm:$0xff]
        %v958 = vld [vmem:[%s12 + $0x18] sm:$0xff]
        %v960 = vperm.slane %v941, 0
        %v962 = vmul.f32 %v942, %v960
        %v963 = vmul.f32 %v943, %v960
        %v964 = vmul.f32 %v944, %v960
        %v965 = vmul.f32 %v945, %v960
        %vm966 = vcmask 261120
        %v967 = vsel %vm966, %v962, 0.0
        %968 = vadd.xlane.f32.xlu0 %v967
        %v969 = vpop.xlane.xlu0 %968
        %v970 = vsel %vm966, %v963, 0.0
        %971 = vadd.xlane.f32.xlu0 %v970
        %v972 = vpop.xlane.xlu0 %971
        %v973 = vsel %vm966, %v964, 0.0
        %974 = vadd.xlane.f32.xlu0 %v973
        %v975 = vpop.xlane.xlu0 %974
        %v976 = vsel %vm966, %v965, 0.0
        %977 = vadd.xlane.f32.xlu0 %v976
        %v978 = vpop.xlane.xlu0 %977
        %v979 = vadd.f32 %v955, %v969
        %v980 = vadd.f32 %v956, %v972
        %v981 = vadd.f32 %v957, %v975
        %v982 = vadd.f32 %v958, %v978
        %v983 = vpack.c.bf16 %v886, %v885
        %v984 = vpack.c.bf16 %v888, %v887
        %986 = vset.pattern.permute.xlu0 0
        %987 = vperm.xlu0 %986, %v979
        %v988 = vpop.permute.xlu0 %987
        %991 = vset.pattern.permute.xlu0 0
        %992 = vperm.xlu0 %991, %v980
        %v993 = vpop.permute.xlu0 %992
        %996 = vset.pattern.permute.xlu0 0
        %997 = vperm.xlu0 %996, %v981
        %v998 = vpop.permute.xlu0 %997
        %1001 = vset.pattern.permute.xlu0 0
        %1002 = vperm.xlu0 %1001, %v982
        %v1003 = vpop.permute.xlu0 %1002
        %v1006 = vsel %vm966, %v953, 0
        %v1009 = vsel %vm966, %v954, 0
        %1011 = vmatpush.bf16.msra.mxu0 0
        %1012 = vmatpush.bf16.msra.mxu0 0
        %1013 = vmatpush.bf16.msra.mxu0 0
        %1014 = vmatpush.bf16.msra.mxu0 0
        %1015 = vmatpush.bf16.msra.mxu0 0
        %1016 = vmatpush.bf16.msra.mxu0 0
        %1017 = vmatpush.bf16.msra.mxu0 %v984
        %1018 = vmatpush.bf16.msra.mxu0 %v983
        %1019 = vmatmul.bf16.gmra.mxu0 %v1006
        %v1020 = vpop.f32.mrf.mxu0
        %v1021 = vadd.f32 %v988, %v1020
        %v1022 = vpop.f32.mrf.mxu0
        %v1023 = vadd.f32 %v993, %v1022
        %1024 = vmatmul.bf16.gmra.mxu0 %v1009
        %v1025 = vpop.f32.mrf.mxu0
        %v1026 = vadd.f32 %v998, %v1025
        %v1027 = vpop.f32.mrf.mxu0
        %v1028 = vadd.f32 %v1003, %v1027
        %1029 = vdwg.mxu0
        %1030 = vst [vmem:[%s466] sm:$0xff] %v1021
        %1031 = vst [vmem:[%s466 + $0x8] sm:$0xff] %v1023
        %1032 = vst [vmem:[%s473] sm:$0xff] %v1026
        %1033 = vst [vmem:[%s473 + $0x8] sm:$0xff] %v1028
        %s1034 = sand.u32 %s320, 1
        %s1035 = scalar_lea.sflag [#allocation5], %s1034
        %s1036 = sand.u32 %s320, 1
        %s1037 = smul.addr %s1036, 16
        %s1038 = scalar_lea.vmem [#allocation4], %s1037
        %s1039 = sand.u32 %s346, 1
        %s1040 = scalar_lea.sflag [#allocation7], %s1039
        %s1041 = sand.u32 %s346, 1
        %s1042 = smul.addr %s1041, 16
        %s1043 = scalar_lea.vmem [#allocation6], %s1042
        // Predicated region
        $region73: #{tpu_custom_call.1} parent=71 // pred_check
          %p1044 = pneg %p330
        $region74: #{tpu_custom_call.1} parent=71 // pred_check_branch
          %1046 = sbr.rel (%p1044) target = $region76
        $region75: #{tpu_custom_call.1} parent=71 // pred_region
          %1048 = vsyncadd %s1035, 0
          %s1049 = smul.addr %s34, 2
          %s1050 = smul.addr %s1049, 8
          %s1051 = scalar_lea.hbm %s13, %s1050
          %s1052 = sshll.u32 %s1038, 4
          %s1053 = int_to_ptr.vmem [resolvable:$true] %s1052
          %s1054 = sshll.u32 %s1051, 4
          %s1055 = int_to_ptr.hbm [resolvable:$true] %s1054
          %1060 = dma.vmem_to_hbm [thread:$0]  %s1053, 256, %s1055, %s1035, 128, 128, 8
        $region76: #{tpu_custom_call.1} parent=71 // pred_fallthru
          _
        // Predicated region
        $region77: #{tpu_custom_call.1} parent=71 // pred_check
          %p1061 = pneg %p356
        $region78: #{tpu_custom_call.1} parent=71 // pred_check_branch
          %1063 = sbr.rel (%p1061) target = $region80
        $region79: #{tpu_custom_call.1} parent=71 // pred_region
          %1065 = vsyncadd %s1040, 0
          %s1066 = smul.addr %s34, 2
          %s1067 = smul.addr %s1066, 8
          %s1068 = scalar_lea.hbm %s14, %s1067
          %s1069 = sshll.u32 %s1043, 4
          %s1070 = int_to_ptr.vmem [resolvable:$true] %s1069
          %s1071 = sshll.u32 %s1068, 4
          %s1072 = int_to_ptr.hbm [resolvable:$true] %s1071
          %1077 = dma.vmem_to_hbm [thread:$0]  %s1070, 256, %s1072, %s1040, 128, 128, 8
        $region80: #{tpu_custom_call.1} parent=71 // pred_fallthru
          _
      $region72: #{tpu_custom_call.1} parent=5 // pred_fallthru
        _
      %p1078 = scmp.le.s32.totalorder 2, %s29
      // Predicated region
      $region81: #{tpu_custom_call.1} parent=5 // pred_check
        %p1079 = pneg %p1078
      $region82: #{tpu_custom_call.1} parent=5 // pred_check_branch
        %1081 = sbr.rel (%p1079) target = $region84
      $region83: #{tpu_custom_call.1} parent=5 // pred_region
        %s1082 = ssub.s32 %s29, 2
        // Predicated region
        $region85: #{tpu_custom_call.1} parent=83 // pred_check
          %p1083 = pneg %p336
        $region86: #{tpu_custom_call.1} parent=83 // pred_check_branch
          %1085 = sbr.rel (%p1083) target = $region88
        $region87: #{tpu_custom_call.1} parent=83 // pred_region
          %s1086 = sand.u32 %s321, 1
          %s1087 = scalar_lea.sflag [#allocation5], %s1086
          %s1088 = sand.u32 %s321, 1
          %s1089 = smul.addr %s1088, 16
          %s1090 = scalar_lea.vmem [#allocation4], %s1089
          %1092 = dma.done %s1087, 256
        $region88: #{tpu_custom_call.1} parent=83 // pred_fallthru
          _
        // Predicated region
        $region89: #{tpu_custom_call.1} parent=83 // pred_check
          %p1093 = pneg %p362
        $region90: #{tpu_custom_call.1} parent=83 // pred_check_branch
          %1095 = sbr.rel (%p1093) target = $region92
        $region91: #{tpu_custom_call.1} parent=83 // pred_region
          %s1096 = sand.u32 %s347, 1
          %s1097 = scalar_lea.sflag [#allocation7], %s1096
          %s1098 = sand.u32 %s347, 1
          %s1099 = smul.addr %s1098, 16
          %s1100 = scalar_lea.vmem [#allocation6], %s1099
          %1102 = dma.done %s1097, 256
        $region92: #{tpu_custom_call.1} parent=83 // pred_fallthru
          _
      $region84: #{tpu_custom_call.1} parent=5 // pred_fallthru
        _
    $region6: #{tpu_custom_call.1} parent=1 // loop_footer
      %s33 = sadd.s32 1, %s29
    $region7: #{tpu_custom_call.1} parent=1 // loop_footer_branch
      %28 = sbr.rel target = $region3
    $region8: #{tpu_custom_call.1} parent=1 // loop_exit
      _
    %1103 = vsyncpa [#allocation5], 1
    %s1104 = scalar_lea.sflag [#allocation5], 1
    %1105 = vsyncpa %s1104, 1
    %1106 = vsyncpa [#allocation7], 1
    %s1107 = scalar_lea.sflag [#allocation7], 1
    %1108 = vsyncpa %s1107, 1

</llo_original>
